<compile_context>
chip_gen: v7x
topology: tpu7x:2x2x1
jax: 0.10.0
libtpu: 0.0.40
codegen_flags: <defaults>
</compile_context>

<pallas_src>
import functools

import numpy as np
import jax
import jax.numpy as jnp
from jax.experimental import pallas as pl
from jax.experimental.pallas import tpu as pltpu

_EPS = 1e-5
_LANE = 128
_VMEM_LIMIT_BYTES = 48 * 1024 * 1024   # explicit scoped-VMEM limit (< v7x 64 MiB phys)
_VMEM_TILE_BUDGET = 16 * 1024 * 1024   # per-grid-step buffer budget used for tiling


def _round_up(x, m):
    return (x + m - 1) // m * m


def _pad_axis(a, target, axis):
    pad = target - a.shape[axis]
    if pad == 0:
        return a
    widths = [(0, 0)] * a.ndim
    widths[axis] = (0, pad)
    return jnp.pad(a, widths)


# ------------------------------ Pallas kernels -------------------------------
def _pw_matmul_and_stats(acc_f32, wpw_ref, y_ref, st_ref):
    """1x1 conv on the MXU (bf16 inputs, f32 accumulate) + BN sum/sum-sq partials."""
    b, h, w, cin = acc_f32.shape
    cout = wpw_ref.shape[1]
    # M = b*h*w rows per matmul (batched grid tile fills the systolic array).
    y = jnp.dot(acc_f32.reshape(b * h * w, cin).astype(jnp.bfloat16),
                wpw_ref[...],
                preferred_element_type=jnp.float32)          # (b*h*w, cout) f32
    y_ref[...] = y.reshape(b, h, w, cout).astype(y_ref.dtype)
    # Single merged (1, 2, C) stats store (one store instead of two masked ones).
    s = jnp.sum(y, axis=0, keepdims=True)
    s2 = jnp.sum(y * y, axis=0, keepdims=True)
    st_ref[...] = jnp.concatenate([s, s2], axis=0)[None]


def _block1_kernel(xp_ref, wdw_ref, wpw_ref, y_ref, st_ref, *, hout, wout, c):
    """dw3x3 stride-2 + 1x1 (bf16 MXU) + BN-1 partial stats for one batch tile.

    xp_ref holds zero-padded stride-2 phases concatenated on channels:
    group g = 2*r + s satisfies xp[:, u, v, g*c:(g+1)*c] == xpad[:, 2u+r, 2v+s, :],
    so a stride-2 tap (kh, kw) is the static unit-stride slice of group
    (kh%2, kw%2) at rows kh//2.. and cols kw//2.. — no strided loads, no im2col.
    """
    wdw = wdw_ref[...]                                   # (9, 1, C), loaded once
    acc = None
    for kh in range(3):
        for kw in range(3):
            g = 2 * (kh % 2) + (kw % 2)
            tap = xp_ref[:, kh // 2:kh // 2 + hout, kw // 2:kw // 2 + wout,
                         g * c:(g + 1) * c]
            term = tap * wdw[kh * 3 + kw]                # f32 VPU accumulate
            acc = term if acc is None else acc + term
    _pw_matmul_and_stats(acc, wpw_ref, y_ref, st_ref)


def _block2_kernel(y1_ref, sc_ref, sh_ref, wdw_ref, wpw_ref, y_ref, st_ref,
                   pad_ref, *, hout, wout):
    """Fused BN-1 + ReLU + dw3x3 stride-1 (in-kernel zero halo) + 1x1 + BN-2 stats."""
    # Normalize / activate block-1's pre-BN tile in VMEM (scale/shift are hoisted).
    a = jnp.maximum(y1_ref[...].astype(jnp.float32) * sc_ref[...] + sh_ref[...], 0.0)
    # Zero halo is created AFTER BN+ReLU (matches PyTorch padding semantics).
    pad_ref[...] = jnp.zeros_like(pad_ref)
    pad_ref[:, 1:1 + hout, 1:1 + wout, :] = a
    wdw = wdw_ref[...]
    acc = None
    for kh in range(3):
        for kw in range(3):
            tap = pad_ref[:, kh:kh + hout, kw:kw + wout, :]
            term = tap * wdw[kh * 3 + kw]
            acc = term if acc is None else acc + term
    _pw_matmul_and_stats(acc, wpw_ref, y_ref, st_ref)


def _bn_relu_kernel(y_ref, sc_ref, sh_ref, o_ref):
    """Streaming BN finalize: y*scale + shift, ReLU (scale/shift precomputed)."""
    o_ref[...] = jnp.maximum(
        y_ref[...].astype(jnp.float32) * sc_ref[...] + sh_ref[...], 0.0)


# ---------------------------- wrapper-side helpers ----------------------------
def _stride2_padded_phases(x):
    """(N, H, W, C) -> (N, H//2+1, W//2+1, 4*C): zero-padded stride-2 phases.

    Group g = 2*r + s satisfies out[:, u, v, g*C:(g+1)*C] == xpad[:, 2u+r, 2v+s, :]
    where xpad is x with a one-pixel zero halo.  Single fused XLA pass.
    """
    # TODO(synk): fold this deinterleave into the kernel itself (needs stride-2
    # sublane loads / in-kernel space-to-depth); kept as one fused XLA pass.
    parts = []
    for r in (0, 1):
        for s in (0, 1):
            a, b = 1 - r, 1 - s
            ph = x[:, a::2, b::2, :]
            parts.append(jnp.pad(ph, ((0, 0), (a, 1 - a), (b, 1 - b), (0, 0))))
    return jnp.concatenate(parts, axis=-1)


def _finalize_bn(stats, gamma, beta, inv_count):
    """Reduce per-tile [sum, sum_sq] partials -> per-channel scale/shift (tiny XLA op)."""
    s = jnp.sum(stats, axis=0)                       # (2, C)
    mean = s[0] * inv_count
    var = s[1] * inv_count - mean * mean             # biased (training-mode) variance
    scale = gamma * jax.lax.rsqrt(var + _EPS)
    shift = beta - mean * scale
    return scale[None], shift[None]                  # (1, C) f32 each


def _pick_batch_tile(n, hw, bytes_per_image):
    """Largest divisor of n under the VMEM budget; prefer the smallest tile that
    already gives >= 512 MXU rows so the grid keeps several steps (pipelining,
    v7x dual-core balance)."""
    divs = [b for b in range(1, n + 1)
            if n % b == 0 and b * bytes_per_image <= _VMEM_TILE_BUDGET]
    if not divs:
        return 1
    good = [b for b in divs if b * hw >= 512]
    return min(good) if good else max(divs)


def _dw_to_kernel(w):   # torch (C, 1, 3, 3) -> (9, 1, C), tap index = kh*3 + kw
    c = w.shape[0]
    return jnp.transpose(w[:, 0], (1, 2, 0)).reshape(9, c)[:, None, :]


def _pw_to_kernel(w):   # torch (Cout, Cin, 1, 1) -> (Cin, Cout)
    return jnp.transpose(w[:, :, 0, 0], (1, 0))


@jax.jit
def sep_conv_forward(x_nchw, params):
    (w_dw1, w_pw1, g1, b1, w_dw2, w_pw2, g2, b2) = params
    n, cin, h, w = x_nchw.shape
    assert h % 2 == 0 and w % 2 == 0, "stride-2 space-to-depth assumes even H, W"
    cout = w_pw2.shape[0]
    cin_p, cout_p = _round_up(cin, _LANE), _round_up(cout, _LANE)
    hout, wout = h // 2, w // 2
    hw = hout * wout
    inv_count = 1.0 / float(n * hw)

    # Lane-dense (x128) channel padding; MXU (1x1) weights pre-cast to bf16 once.
    wdw1 = _pad_axis(_dw_to_kernel(w_dw1), cin_p, -1)
    wpw1 = _pad_axis(_pad_axis(_pw_to_kernel(w_pw1), cin_p, 0), cin_p, 1)
    wpw1 = wpw1.astype(jnp.bfloat16)
    wdw2 = _pad_axis(_dw_to_kernel(w_dw2), cin_p, -1)
    wpw2 = _pad_axis(_pad_axis(_pw_to_kernel(w_pw2), cin_p, 0), cout_p, 1)
    wpw2 = wpw2.astype(jnp.bfloat16)
    g1p = _pad_axis(g1.reshape(-1), cin_p, 0)
    b1p = _pad_axis(b1.reshape(-1), cin_p, 0)
    g2p = _pad_axis(g2.reshape(-1), cout_p, 0)
    b2p = _pad_axis(b2.reshape(-1), cout_p, 0)

    # NCHW -> NHWC once, then the single XLA prep pass for the stride-2 stage.
    x = _pad_axis(jnp.transpose(x_nchw, (0, 2, 3, 1)), cin_p, -1)
    xp = _stride2_padded_phases(x)                    # (n, hout+1, wout+1, 4*cin_p)

    # Batch tiling: M = bt*hw rows per MXU call, bounded by a per-step VMEM budget.
    per_img = max(
        2 * ((hout + 1) * (wout + 1) * 4 * cin_p * 4 + hw * cin_p * 2),           # pass 1
        2 * (hw * cin_p * 2 + hw * cout_p * 2)
        + (hout + 2) * (wout + 2) * cin_p * 4,                                    # pass 2
        2 * (hw * cout_p * 2 + hw * cout_p * 4),                                  # pass 3
    )
    bt = _pick_batch_tile(n, hw, per_img)
    nt = n // bt
    cparams = pltpu.CompilerParams(dimension_semantics=("parallel",),
                                   vmem_limit_bytes=_VMEM_LIMIT_BYTES)

    # Pass 1: dw3x3 stride-2 + 1x1 (bf16 MXU) + BN-1 partial stats (y1 kept bf16).
    y1, st1 = pl.pallas_call(
        functools.partial(_block1_kernel, hout=hout, wout=wout, c=cin_p),
        grid=(nt,),
        in_specs=[pl.BlockSpec((bt, hout + 1, wout + 1, 4 * cin_p),
                               lambda i: (i, 0, 0, 0)),
                  pl.BlockSpec((9, 1, cin_p), lambda i: (0, 0, 0)),        # resident
                  pl.BlockSpec((cin_p, cin_p), lambda i: (0, 0))],         # resident
        out_specs=(pl.BlockSpec((bt, hout, wout, cin_p), lambda i: (i, 0, 0, 0)),
                   pl.BlockSpec((1, 2, cin_p), lambda i: (i, 0, 0))),
        out_shape=(jax.ShapeDtypeStruct((n, hout, wout, cin_p), jnp.bfloat16),
                   jax.ShapeDtypeStruct((nt, 2, cin_p), jnp.float32)),
        compiler_params=cparams,
    )(xp, wdw1, wpw1)

    sc1, sh1 = _finalize_bn(st1, g1p, b1p, inv_count)       # (1, cin_p) each, tiny

    # Pass 2: fused BN-1+ReLU + dw3x3 stride-1 (in-kernel halo) + 1x1 + BN-2 stats.
    y2, st2 = pl.pallas_call(
        functools.partial(_block2_kernel, hout=hout, wout=wout),
        grid=(nt,),
        in_specs=[pl.BlockSpec((bt, hout, wout, cin_p), lambda i: (i, 0, 0, 0)),
                  pl.BlockSpec((1, cin_p), lambda i: (0, 0)),              # resident
                  pl.BlockSpec((1, cin_p), lambda i: (0, 0)),              # resident
                  pl.BlockSpec((9, 1, cin_p), lambda i: (0, 0, 0)),        # resident
                  pl.BlockSpec((cin_p, cout_p), lambda i: (0, 0))],        # resident
        out_specs=(pl.BlockSpec((bt, hout, wout, cout_p), lambda i: (i, 0, 0, 0)),
                   pl.BlockSpec((1, 2, cout_p), lambda i: (i, 0, 0))),
        out_shape=(jax.ShapeDtypeStruct((n, hout, wout, cout_p), jnp.bfloat16),
                   jax.ShapeDtypeStruct((nt, 2, cout_p), jnp.float32)),
        scratch_shapes=[pltpu.VMEM((bt, hout + 2, wout + 2, cin_p), jnp.float32)],
        compiler_params=cparams,
    )(y1, sc1, sh1, wdw2, wpw2)

    sc2, sh2 = _finalize_bn(st2, g2p, b2p, inv_count)

    # Pass 3: streaming BN-2 + ReLU (scale/shift precomputed; pure scale+shift).
    y3 = pl.pallas_call(
        _bn_relu_kernel,
        grid=(nt,),
        in_specs=[pl.BlockSpec((bt, hout, wout, cout_p), lambda i: (i, 0, 0, 0)),
                  pl.BlockSpec((1, cout_p), lambda i: (0, 0)),
                  pl.BlockSpec((1, cout_p), lambda i: (0, 0))],
        out_specs=pl.BlockSpec((bt, hout, wout, cout_p), lambda i: (i, 0, 0, 0)),
        out_shape=jax.ShapeDtypeStruct((n, hout, wout, cout_p), jnp.float32),
        compiler_params=cparams,
    )(y2, sc2, sh2)

    return jnp.transpose(y3[..., :cout], (0, 3, 1, 2))      # NHWC -> NCHW, drop pad


# ---------------- pure-JAX reference (for correctness check) -----------------
def _ref_sepconv(x, params):
    (w_dw1, w_pw1, g1, b1, w_dw2, w_pw2, g2, b2) = params

    def dwconv(x, w, stride):
        c = x.shape[1]
        return jax.lax.conv_general_dilated(
            x, w, (stride, stride), ((1, 1), (1, 1)),
            feature_group_count=c,
            dimension_numbers=("NCHW", "OIHW", "NCHW"),
            precision=jax.lax.Precision.HIGHEST)

    def pwconv(x, w):
        return jax.lax.conv_general_dilated(
            x, w, (1, 1), "VALID",
            dimension_numbers=("NCHW", "OIHW", "NCHW"),
            precision=jax.lax.Precision.HIGHEST)

    def bn_relu(x, gamma, beta):
        mean = jnp.mean(x, axis=(0, 2, 3), keepdims=True)
        var = jnp.mean((x - mean) ** 2, axis=(0, 2, 3), keepdims=True)
        xh = (x - mean) / jnp.sqrt(var + _EPS)
        xh = xh * gamma.reshape(1, -1, 1, 1) + beta.reshape(1, -1, 1, 1)
        return jnp.maximum(xh, 0.0)

    y = bn_relu(pwconv(dwconv(x, w_dw1, 2), w_pw1), g1, b1)
    y = bn_relu(pwconv(dwconv(y, w_dw2, 1), w_pw2), g2, b2)
    return y


if __name__ == "__main__":
    key = jax.random.PRNGKey(0)
    ks = jax.random.split(key, 9)
    N, C_IN, C_OUT, H, W = 2, 4, 8, 16, 16

    x = jax.random.normal(ks[0], (N, C_IN, H, W), jnp.float32)
    # Deterministic synthetic parameters (shapes match the nn.Module's layers).
    w_dw1 = 0.3 * jax.random.normal(ks[1], (C_IN, 1, 3, 3), jnp.float32)
    w_pw1 = 0.3 * jax.random.normal(ks[2], (C_IN, C_IN, 1, 1), jnp.float32)
    g1 = 1.0 + 0.1 * jax.random.normal(ks[3], (1, C_IN), jnp.float32)
    b1 = 0.1 * jax.random.normal(ks[4], (1, C_IN), jnp.float32)
    w_dw2 = 0.3 * jax.random.normal(ks[5], (C_IN, 1, 3, 3), jnp.float32)
    w_pw2 = 0.3 * jax.random.normal(ks[6], (C_OUT, C_IN, 1, 1), jnp.float32)
    g2 = 1.0 + 0.1 * jax.random.normal(ks[7], (1, C_OUT), jnp.float32)
    b2 = 0.1 * jax.random.normal(ks[8], (1, C_OUT), jnp.float32)
    params = (w_dw1, w_pw1, g1, b1, w_dw2, w_pw2, g2, b2)

    out = jax.block_until_ready(sep_conv_forward(x, params))
    ref = jax.block_until_ready(_ref_sepconv(x, params))
    assert out.shape == (N, C_OUT, H // 2, W // 2), out.shape
    # Tolerance sized for the bf16-MXU pipeline (two BN stages) vs f32 reference.
    np.testing.assert_allclose(np.asarray(out), np.asarray(ref), rtol=3e-2, atol=3e-2)
    print("KERNEL_OK")
</pallas_src>

<mosaic_0001>
module attributes {stable_mosaic.version = 11 : i64} {
  func.func @_block1_kernel(%arg0: i32, %arg1: memref<2x9x9x512xf32, #tpu.memory_space<vmem>>, %arg2: memref<9x1x128xf32, #tpu.memory_space<vmem>>, %arg3: memref<128x128xbf16, #tpu.memory_space<vmem>>, %arg4: memref<2x8x8x128xbf16, #tpu.memory_space<vmem>>, %arg5: memref<1x2x128xf32, #tpu.memory_space<vmem>>) attributes {dimension_semantics = [#tpu.dimension_semantics<parallel>], iteration_bounds = array<i64: 1>, scalar_prefetch = 0 : i64, scratch_operands = 0 : i64, tpu.core_type = #tpu.core_type<tc>, window_params = [{transform_indices = @transform_0, window_bounds = array<i64: 2, 9, 9, 512>}, {pipeline_mode = #tpu.pipeline_mode<synchronous>, transform_indices = @transform_1, window_bounds = array<i64: 9, 1, 128>}, {pipeline_mode = #tpu.pipeline_mode<synchronous>, transform_indices = @transform_2, window_bounds = array<i64: 128, 128>}, {transform_indices = @transform_3, window_bounds = array<i64: 2, 8, 8, 128>}, {transform_indices = @transform_4, window_bounds = array<i64: 1, 2, 128>}]} {
    %c0 = arith.constant 0 : index
    %c0_0 = arith.constant 0 : index
    %c0_1 = arith.constant 0 : index
    %0 = vector.load %arg2[%c0, %c0_0, %c0_1] : memref<9x1x128xf32, #tpu.memory_space<vmem>>, vector<9x1x128xf32>
    %c0_2 = arith.constant 0 : index
    %c0_3 = arith.constant 0 : index
    %c0_4 = arith.constant 0 : index
    %c0_5 = arith.constant 0 : index
    %1 = vector.load %arg1[%c0_2, %c0_3, %c0_4, %c0_5] : memref<2x9x9x512xf32, #tpu.memory_space<vmem>>, vector<2x8x8x128xf32>
    %2 = vector.extract_strided_slice %0 {offsets = [0, 0, 0], sizes = [1, 1, 128], strides = [1, 1, 1]} : vector<9x1x128xf32> to vector<1x1x128xf32>
    %3 = vector.shape_cast %2 : vector<1x1x128xf32> to vector<1x128xf32>
    %4 = vector.shape_cast %3 : vector<1x128xf32> to vector<1x1x1x128xf32>
    %5 = vector.broadcast %4 : vector<1x1x1x128xf32> to vector<2x8x8x128xf32>
    %6 = arith.mulf %1, %5 : vector<2x8x8x128xf32>
    %c0_6 = arith.constant 0 : index
    %c0_7 = arith.constant 0 : index
    %c0_8 = arith.constant 0 : index
    %c128 = arith.constant 128 : index
    %7 = vector.load %arg1[%c0_6, %c0_7, %c0_8, %c128] : memref<2x9x9x512xf32, #tpu.memory_space<vmem>>, vector<2x8x8x128xf32>
    %8 = vector.extract_strided_slice %0 {offsets = [1, 0, 0], sizes = [1, 1, 128], strides = [1, 1, 1]} : vector<9x1x128xf32> to vector<1x1x128xf32>
    %9 = vector.shape_cast %8 : vector<1x1x128xf32> to vector<1x128xf32>
    %10 = vector.shape_cast %9 : vector<1x128xf32> to vector<1x1x1x128xf32>
    %11 = vector.broadcast %10 : vector<1x1x1x128xf32> to vector<2x8x8x128xf32>
    %12 = arith.mulf %7, %11 : vector<2x8x8x128xf32>
    %13 = arith.addf %6, %12 : vector<2x8x8x128xf32>
    %c0_9 = arith.constant 0 : index
    %c0_10 = arith.constant 0 : index
    %c1 = arith.constant 1 : index
    %c0_11 = arith.constant 0 : index
    %14 = vector.load %arg1[%c0_9, %c0_10, %c1, %c0_11] : memref<2x9x9x512xf32, #tpu.memory_space<vmem>>, vector<2x8x8x128xf32>
    %15 = vector.extract_strided_slice %0 {offsets = [2, 0, 0], sizes = [1, 1, 128], strides = [1, 1, 1]} : vector<9x1x128xf32> to vector<1x1x128xf32>
    %16 = vector.shape_cast %15 : vector<1x1x128xf32> to vector<1x128xf32>
    %17 = vector.shape_cast %16 : vector<1x128xf32> to vector<1x1x1x128xf32>
    %18 = vector.broadcast %17 : vector<1x1x1x128xf32> to vector<2x8x8x128xf32>
    %19 = arith.mulf %14, %18 : vector<2x8x8x128xf32>
    %20 = arith.addf %13, %19 : vector<2x8x8x128xf32>
    %c0_12 = arith.constant 0 : index
    %c0_13 = arith.constant 0 : index
    %c0_14 = arith.constant 0 : index
    %c256 = arith.constant 256 : index
    %21 = vector.load %arg1[%c0_12, %c0_13, %c0_14, %c256] : memref<2x9x9x512xf32, #tpu.memory_space<vmem>>, vector<2x8x8x128xf32>
    %22 = vector.extract_strided_slice %0 {offsets = [3, 0, 0], sizes = [1, 1, 128], strides = [1, 1, 1]} : vector<9x1x128xf32> to vector<1x1x128xf32>
    %23 = vector.shape_cast %22 : vector<1x1x128xf32> to vector<1x128xf32>
    %24 = vector.shape_cast %23 : vector<1x128xf32> to vector<1x1x1x128xf32>
    %25 = vector.broadcast %24 : vector<1x1x1x128xf32> to vector<2x8x8x128xf32>
    %26 = arith.mulf %21, %25 : vector<2x8x8x128xf32>
    %27 = arith.addf %20, %26 : vector<2x8x8x128xf32>
    %c0_15 = arith.constant 0 : index
    %c0_16 = arith.constant 0 : index
    %c0_17 = arith.constant 0 : index
    %c384 = arith.constant 384 : index
    %28 = vector.load %arg1[%c0_15, %c0_16, %c0_17, %c384] : memref<2x9x9x512xf32, #tpu.memory_space<vmem>>, vector<2x8x8x128xf32>
    %29 = vector.extract_strided_slice %0 {offsets = [4, 0, 0], sizes = [1, 1, 128], strides = [1, 1, 1]} : vector<9x1x128xf32> to vector<1x1x128xf32>
    %30 = vector.shape_cast %29 : vector<1x1x128xf32> to vector<1x128xf32>
    %31 = vector.shape_cast %30 : vector<1x128xf32> to vector<1x1x1x128xf32>
    %32 = vector.broadcast %31 : vector<1x1x1x128xf32> to vector<2x8x8x128xf32>
    %33 = arith.mulf %28, %32 : vector<2x8x8x128xf32>
    %34 = arith.addf %27, %33 : vector<2x8x8x128xf32>
    %c0_18 = arith.constant 0 : index
    %c0_19 = arith.constant 0 : index
    %c1_20 = arith.constant 1 : index
    %c256_21 = arith.constant 256 : index
    %35 = vector.load %arg1[%c0_18, %c0_19, %c1_20, %c256_21] : memref<2x9x9x512xf32, #tpu.memory_space<vmem>>, vector<2x8x8x128xf32>
    %36 = vector.extract_strided_slice %0 {offsets = [5, 0, 0], sizes = [1, 1, 128], strides = [1, 1, 1]} : vector<9x1x128xf32> to vector<1x1x128xf32>
    %37 = vector.shape_cast %36 : vector<1x1x128xf32> to vector<1x128xf32>
    %38 = vector.shape_cast %37 : vector<1x128xf32> to vector<1x1x1x128xf32>
    %39 = vector.broadcast %38 : vector<1x1x1x128xf32> to vector<2x8x8x128xf32>
    %40 = arith.mulf %35, %39 : vector<2x8x8x128xf32>
    %41 = arith.addf %34, %40 : vector<2x8x8x128xf32>
    %c0_22 = arith.constant 0 : index
    %c1_23 = arith.constant 1 : index
    %c0_24 = arith.constant 0 : index
    %c0_25 = arith.constant 0 : index
    %42 = vector.load %arg1[%c0_22, %c1_23, %c0_24, %c0_25] : memref<2x9x9x512xf32, #tpu.memory_space<vmem>>, vector<2x8x8x128xf32>
    %43 = vector.extract_strided_slice %0 {offsets = [6, 0, 0], sizes = [1, 1, 128], strides = [1, 1, 1]} : vector<9x1x128xf32> to vector<1x1x128xf32>
    %44 = vector.shape_cast %43 : vector<1x1x128xf32> to vector<1x128xf32>
    %45 = vector.shape_cast %44 : vector<1x128xf32> to vector<1x1x1x128xf32>
    %46 = vector.broadcast %45 : vector<1x1x1x128xf32> to vector<2x8x8x128xf32>
    %47 = arith.mulf %42, %46 : vector<2x8x8x128xf32>
    %48 = arith.addf %41, %47 : vector<2x8x8x128xf32>
    %c0_26 = arith.constant 0 : index
    %c1_27 = arith.constant 1 : index
    %c0_28 = arith.constant 0 : index
    %c128_29 = arith.constant 128 : index
    %49 = vector.load %arg1[%c0_26, %c1_27, %c0_28, %c128_29] : memref<2x9x9x512xf32, #tpu.memory_space<vmem>>, vector<2x8x8x128xf32>
    %50 = vector.extract_strided_slice %0 {offsets = [7, 0, 0], sizes = [1, 1, 128], strides = [1, 1, 1]} : vector<9x1x128xf32> to vector<1x1x128xf32>
    %51 = vector.shape_cast %50 : vector<1x1x128xf32> to vector<1x128xf32>
    %52 = vector.shape_cast %51 : vector<1x128xf32> to vector<1x1x1x128xf32>
    %53 = vector.broadcast %52 : vector<1x1x1x128xf32> to vector<2x8x8x128xf32>
    %54 = arith.mulf %49, %53 : vector<2x8x8x128xf32>
    %55 = arith.addf %48, %54 : vector<2x8x8x128xf32>
    %c0_30 = arith.constant 0 : index
    %c1_31 = arith.constant 1 : index
    %c1_32 = arith.constant 1 : index
    %c0_33 = arith.constant 0 : index
    %56 = vector.load %arg1[%c0_30, %c1_31, %c1_32, %c0_33] : memref<2x9x9x512xf32, #tpu.memory_space<vmem>>, vector<2x8x8x128xf32>
    %57 = vector.extract_strided_slice %0 {offsets = [8, 0, 0], sizes = [1, 1, 128], strides = [1, 1, 1]} : vector<9x1x128xf32> to vector<1x1x128xf32>
    %58 = vector.shape_cast %57 : vector<1x1x128xf32> to vector<1x128xf32>
    %59 = vector.shape_cast %58 : vector<1x128xf32> to vector<1x1x1x128xf32>
    %60 = vector.broadcast %59 : vector<1x1x1x128xf32> to vector<2x8x8x128xf32>
    %61 = arith.mulf %56, %60 : vector<2x8x8x128xf32>
    %62 = arith.addf %55, %61 : vector<2x8x8x128xf32>
    %63 = vector.shape_cast %62 : vector<2x8x8x128xf32> to vector<128x128xf32>
    %64 = arith.truncf %63 : vector<128x128xf32> to vector<128x128xbf16>
    %c0_34 = arith.constant 0 : index
    %c0_35 = arith.constant 0 : index
    %65 = vector.load %arg3[%c0_34, %c0_35] : memref<128x128xbf16, #tpu.memory_space<vmem>>, vector<128x128xbf16>
    %cst = arith.constant dense<0.000000e+00> : vector<128x128xf32>
    %66 = tpu.matmul %64, %65, %cst {dimension_numbers = #tpu.dot_dimension_numbers<[1], [0], [0], [1], [0, 0, 1, 1], [], []>} : vector<128x128xbf16>, vector<128x128xbf16>, vector<128x128xf32> -> vector<128x128xf32>
    %67 = vector.shape_cast %66 : vector<128x128xf32> to vector<2x8x8x128xf32>
    %68 = arith.truncf %67 : vector<2x8x8x128xf32> to vector<2x8x8x128xbf16>
    %c0_36 = arith.constant 0 : index
    %c0_37 = arith.constant 0 : index
    %c0_38 = arith.constant 0 : index
    %c0_39 = arith.constant 0 : index
    %69 = vector.load %arg4[%c0_36, %c0_37, %c0_38, %c0_39] : memref<2x8x8x128xbf16, #tpu.memory_space<vmem>>, vector<2x8x8x128xbf16>
    tpu.vector_store %arg4[%c0_36, %c0_37, %c0_38, %c0_39], %68 {strides = array<i32>} : memref<2x8x8x128xbf16, #tpu.memory_space<vmem>>, vector<2x8x8x128xbf16>,
    %cst_40 = arith.constant dense<0.000000e+00> : vector<128xf32>
    %70 = vector.multi_reduction <add>, %66, %cst_40 [0] : vector<128x128xf32> to vector<128xf32>
    %71 = vector.shape_cast %70 : vector<128xf32> to vector<1x128xf32>
    %72 = arith.mulf %66, %66 : vector<128x128xf32>
    %cst_41 = arith.constant dense<0.000000e+00> : vector<128xf32>
    %73 = vector.multi_reduction <add>, %72, %cst_41 [0] : vector<128x128xf32> to vector<128xf32>
    %74 = vector.shape_cast %73 : vector<128xf32> to vector<1x128xf32>
    %75 = tpu.concatenate %71, %74 in 0 : vector<1x128xf32>, vector<1x128xf32> -> vector<2x128xf32>
    %76 = vector.shape_cast %75 : vector<2x128xf32> to vector<1x2x128xf32>
    %c0_42 = arith.constant 0 : index
    %c0_43 = arith.constant 0 : index
    %c0_44 = arith.constant 0 : index
    %77 = vector.load %arg5[%c0_42, %c0_43, %c0_44] : memref<1x2x128xf32, #tpu.memory_space<vmem>>, vector<1x2x128xf32>
    tpu.vector_store %arg5[%c0_42, %c0_43, %c0_44], %76 {strides = array<i32>} : memref<1x2x128xf32, #tpu.memory_space<vmem>>, vector<1x2x128xf32>,
    return
  }
  func.func @transform_0(%arg0: i32) -> (i32, i32, i32, i32) {
    %c0_i32 = arith.constant 0 : i32
    %c0_i32_0 = arith.constant 0 : i32
    %c0_i32_1 = arith.constant 0 : i32
    %c0_i32_2 = arith.constant 0 : i32
    return %arg0, %c0_i32, %c0_i32_0, %c0_i32_1 : i32, i32, i32, i32
  }
  func.func @transform_1(%arg0: i32) -> (i32, i32, i32) {
    %c0_i32 = arith.constant 0 : i32
    %c0_i32_0 = arith.constant 0 : i32
    %c0_i32_1 = arith.constant 0 : i32
    %c0_i32_2 = arith.constant 0 : i32
    return %c0_i32, %c0_i32_0, %c0_i32_1 : i32, i32, i32
  }
  func.func @transform_2(%arg0: i32) -> (i32, i32) {
    %c0_i32 = arith.constant 0 : i32
    %c0_i32_0 = arith.constant 0 : i32
    %c0_i32_1 = arith.constant 0 : i32
    return %c0_i32, %c0_i32_0 : i32, i32
  }
  func.func @transform_3(%arg0: i32) -> (i32, i32, i32, i32) {
    %c0_i32 = arith.constant 0 : i32
    %c0_i32_0 = arith.constant 0 : i32
    %c0_i32_1 = arith.constant 0 : i32
    %c0_i32_2 = arith.constant 0 : i32
    return %arg0, %c0_i32, %c0_i32_0, %c0_i32_1 : i32, i32, i32, i32
  }
  func.func @transform_4(%arg0: i32) -> (i32, i32, i32) {
    %c0_i32 = arith.constant 0 : i32
    %c0_i32_0 = arith.constant 0 : i32
    %c0_i32_1 = arith.constant 0 : i32
    return %arg0, %c0_i32, %c0_i32_0 : i32, i32, i32
  }
}

module attributes {stable_mosaic.version = 11 : i64} {
  func.func @_block2_kernel(%arg0: i32, %arg1: memref<2x8x8x128xbf16, #tpu.memory_space<vmem>>, %arg2: memref<1x128xf32, #tpu.memory_space<vmem>>, %arg3: memref<1x128xf32, #tpu.memory_space<vmem>>, %arg4: memref<9x1x128xf32, #tpu.memory_space<vmem>>, %arg5: memref<128x128xbf16, #tpu.memory_space<vmem>>, %arg6: memref<2x8x8x128xbf16, #tpu.memory_space<vmem>>, %arg7: memref<1x2x128xf32, #tpu.memory_space<vmem>>, %arg8: memref<2x10x10x128xf32, #tpu.memory_space<vmem>>) attributes {dimension_semantics = [#tpu.dimension_semantics<parallel>], iteration_bounds = array<i64: 1>, scalar_prefetch = 0 : i64, scratch_operands = 1 : i64, tpu.core_type = #tpu.core_type<tc>, window_params = [{transform_indices = @transform_0, window_bounds = array<i64: 2, 8, 8, 128>}, {pipeline_mode = #tpu.pipeline_mode<synchronous>, transform_indices = @transform_1, window_bounds = array<i64: 1, 128>}, {pipeline_mode = #tpu.pipeline_mode<synchronous>, transform_indices = @transform_2, window_bounds = array<i64: 1, 128>}, {pipeline_mode = #tpu.pipeline_mode<synchronous>, transform_indices = @transform_3, window_bounds = array<i64: 9, 1, 128>}, {pipeline_mode = #tpu.pipeline_mode<synchronous>, transform_indices = @transform_4, window_bounds = array<i64: 128, 128>}, {transform_indices = @transform_5, window_bounds = array<i64: 2, 8, 8, 128>}, {transform_indices = @transform_6, window_bounds = array<i64: 1, 2, 128>}]} {
    %c0 = arith.constant 0 : index
    %c0_0 = arith.constant 0 : index
    %c0_1 = arith.constant 0 : index
    %c0_2 = arith.constant 0 : index
    %0 = vector.load %arg1[%c0, %c0_0, %c0_1, %c0_2] : memref<2x8x8x128xbf16, #tpu.memory_space<vmem>>, vector<2x8x8x128xbf16>
    %1 = arith.extf %0 : vector<2x8x8x128xbf16> to vector<2x8x8x128xf32>
    %c0_3 = arith.constant 0 : index
    %c0_4 = arith.constant 0 : index
    %2 = vector.load %arg2[%c0_3, %c0_4] : memref<1x128xf32, #tpu.memory_space<vmem>>, vector<1x128xf32>
    %3 = vector.shape_cast %2 : vector<1x128xf32> to vector<1x1x1x128xf32>
    %4 = vector.broadcast %3 : vector<1x1x1x128xf32> to vector<2x8x8x128xf32>
    %5 = arith.mulf %1, %4 : vector<2x8x8x128xf32>
    %c0_5 = arith.constant 0 : index
    %c0_6 = arith.constant 0 : index
    %6 = vector.load %arg3[%c0_5, %c0_6] : memref<1x128xf32, #tpu.memory_space<vmem>>, vector<1x128xf32>
    %7 = vector.shape_cast %6 : vector<1x128xf32> to vector<1x1x1x128xf32>
    %8 = vector.broadcast %7 : vector<1x1x1x128xf32> to vector<2x8x8x128xf32>
    %9 = arith.addf %5, %8 : vector<2x8x8x128xf32>
    %cst = arith.constant 0.000000e+00 : f32
    %10 = vector.broadcast %cst : f32 to vector<2x8x8x128xf32>
    %11 = arith.maximumf %9, %10 : vector<2x8x8x128xf32>
    %cst_7 = arith.constant 0.000000e+00 : f32
    %12 = vector.broadcast %cst_7 : f32 to vector<2x10x10x128xf32>
    %c0_8 = arith.constant 0 : index
    %c0_9 = arith.constant 0 : index
    %c0_10 = arith.constant 0 : index
    %c0_11 = arith.constant 0 : index
    %13 = vector.load %arg8[%c0_8, %c0_9, %c0_10, %c0_11] : memref<2x10x10x128xf32, #tpu.memory_space<vmem>>, vector<2x10x10x128xf32>
    tpu.vector_store %arg8[%c0_8, %c0_9, %c0_10, %c0_11], %12 {strides = array<i32>} : memref<2x10x10x128xf32, #tpu.memory_space<vmem>>, vector<2x10x10x128xf32>,
    %c0_12 = arith.constant 0 : index
    %c1 = arith.constant 1 : index
    %c1_13 = arith.constant 1 : index
    %c0_14 = arith.constant 0 : index
    %14 = vector.load %arg8[%c0_12, %c1, %c1_13, %c0_14] : memref<2x10x10x128xf32, #tpu.memory_space<vmem>>, vector<2x8x8x128xf32>
    tpu.vector_store %arg8[%c0_12, %c1, %c1_13, %c0_14], %11 {strides = array<i32>} : memref<2x10x10x128xf32, #tpu.memory_space<vmem>>, vector<2x8x8x128xf32>,
    %c0_15 = arith.constant 0 : index
    %c0_16 = arith.constant 0 : index
    %c0_17 = arith.constant 0 : index
    %15 = vector.load %arg4[%c0_15, %c0_16, %c0_17] : memref<9x1x128xf32, #tpu.memory_space<vmem>>, vector<9x1x128xf32>
    %c0_18 = arith.constant 0 : index
    %c0_19 = arith.constant 0 : index
    %c0_20 = arith.constant 0 : index
    %c0_21 = arith.constant 0 : index
    %16 = vector.load %arg8[%c0_18, %c0_19, %c0_20, %c0_21] : memref<2x10x10x128xf32, #tpu.memory_space<vmem>>, vector<2x8x8x128xf32>
    %17 = vector.extract_strided_slice %15 {offsets = [0, 0, 0], sizes = [1, 1, 128], strides = [1, 1, 1]} : vector<9x1x128xf32> to vector<1x1x128xf32>
    %18 = vector.shape_cast %17 : vector<1x1x128xf32> to vector<1x128xf32>
    %19 = vector.shape_cast %18 : vector<1x128xf32> to vector<1x1x1x128xf32>
    %20 = vector.broadcast %19 : vector<1x1x1x128xf32> to vector<2x8x8x128xf32>
    %21 = arith.mulf %16, %20 : vector<2x8x8x128xf32>
    %c0_22 = arith.constant 0 : index
    %c0_23 = arith.constant 0 : index
    %c1_24 = arith.constant 1 : index
    %c0_25 = arith.constant 0 : index
    %22 = vector.load %arg8[%c0_22, %c0_23, %c1_24, %c0_25] : memref<2x10x10x128xf32, #tpu.memory_space<vmem>>, vector<2x8x8x128xf32>
    %23 = vector.extract_strided_slice %15 {offsets = [1, 0, 0], sizes = [1, 1, 128], strides = [1, 1, 1]} : vector<9x1x128xf32> to vector<1x1x128xf32>
    %24 = vector.shape_cast %23 : vector<1x1x128xf32> to vector<1x128xf32>
    %25 = vector.shape_cast %24 : vector<1x128xf32> to vector<1x1x1x128xf32>
    %26 = vector.broadcast %25 : vector<1x1x1x128xf32> to vector<2x8x8x128xf32>
    %27 = arith.mulf %22, %26 : vector<2x8x8x128xf32>
    %28 = arith.addf %21, %27 : vector<2x8x8x128xf32>
    %c0_26 = arith.constant 0 : index
    %c0_27 = arith.constant 0 : index
    %c2 = arith.constant 2 : index
    %c0_28 = arith.constant 0 : index
    %29 = vector.load %arg8[%c0_26, %c0_27, %c2, %c0_28] : memref<2x10x10x128xf32, #tpu.memory_space<vmem>>, vector<2x8x8x128xf32>
    %30 = vector.extract_strided_slice %15 {offsets = [2, 0, 0], sizes = [1, 1, 128], strides = [1, 1, 1]} : vector<9x1x128xf32> to vector<1x1x128xf32>
    %31 = vector.shape_cast %30 : vector<1x1x128xf32> to vector<1x128xf32>
    %32 = vector.shape_cast %31 : vector<1x128xf32> to vector<1x1x1x128xf32>
    %33 = vector.broadcast %32 : vector<1x1x1x128xf32> to vector<2x8x8x128xf32>
    %34 = arith.mulf %29, %33 : vector<2x8x8x128xf32>
    %35 = arith.addf %28, %34 : vector<2x8x8x128xf32>
    %c0_29 = arith.constant 0 : index
    %c1_30 = arith.constant 1 : index
    %c0_31 = arith.constant 0 : index
    %c0_32 = arith.constant 0 : index
    %36 = vector.load %arg8[%c0_29, %c1_30, %c0_31, %c0_32] : memref<2x10x10x128xf32, #tpu.memory_space<vmem>>, vector<2x8x8x128xf32>
    %37 = vector.extract_strided_slice %15 {offsets = [3, 0, 0], sizes = [1, 1, 128], strides = [1, 1, 1]} : vector<9x1x128xf32> to vector<1x1x128xf32>
    %38 = vector.shape_cast %37 : vector<1x1x128xf32> to vector<1x128xf32>
    %39 = vector.shape_cast %38 : vector<1x128xf32> to vector<1x1x1x128xf32>
    %40 = vector.broadcast %39 : vector<1x1x1x128xf32> to vector<2x8x8x128xf32>
    %41 = arith.mulf %36, %40 : vector<2x8x8x128xf32>
    %42 = arith.addf %35, %41 : vector<2x8x8x128xf32>
    %c0_33 = arith.constant 0 : index
    %c1_34 = arith.constant 1 : index
    %c1_35 = arith.constant 1 : index
    %c0_36 = arith.constant 0 : index
    %43 = vector.load %arg8[%c0_33, %c1_34, %c1_35, %c0_36] : memref<2x10x10x128xf32, #tpu.memory_space<vmem>>, vector<2x8x8x128xf32>
    %44 = vector.extract_strided_slice %15 {offsets = [4, 0, 0], sizes = [1, 1, 128], strides = [1, 1, 1]} : vector<9x1x128xf32> to vector<1x1x128xf32>
    %45 = vector.shape_cast %44 : vector<1x1x128xf32> to vector<1x128xf32>
    %46 = vector.shape_cast %45 : vector<1x128xf32> to vector<1x1x1x128xf32>
    %47 = vector.broadcast %46 : vector<1x1x1x128xf32> to vector<2x8x8x128xf32>
    %48 = arith.mulf %43, %47 : vector<2x8x8x128xf32>
    %49 = arith.addf %42, %48 : vector<2x8x8x128xf32>
    %c0_37 = arith.constant 0 : index
    %c1_38 = arith.constant 1 : index
    %c2_39 = arith.constant 2 : index
    %c0_40 = arith.constant 0 : index
    %50 = vector.load %arg8[%c0_37, %c1_38, %c2_39, %c0_40] : memref<2x10x10x128xf32, #tpu.memory_space<vmem>>, vector<2x8x8x128xf32>
    %51 = vector.extract_strided_slice %15 {offsets = [5, 0, 0], sizes = [1, 1, 128], strides = [1, 1, 1]} : vector<9x1x128xf32> to vector<1x1x128xf32>
    %52 = vector.shape_cast %51 : vector<1x1x128xf32> to vector<1x128xf32>
    %53 = vector.shape_cast %52 : vector<1x128xf32> to vector<1x1x1x128xf32>
    %54 = vector.broadcast %53 : vector<1x1x1x128xf32> to vector<2x8x8x128xf32>
    %55 = arith.mulf %50, %54 : vector<2x8x8x128xf32>
    %56 = arith.addf %49, %55 : vector<2x8x8x128xf32>
    %c0_41 = arith.constant 0 : index
    %c2_42 = arith.constant 2 : index
    %c0_43 = arith.constant 0 : index
    %c0_44 = arith.constant 0 : index
    %57 = vector.load %arg8[%c0_41, %c2_42, %c0_43, %c0_44] : memref<2x10x10x128xf32, #tpu.memory_space<vmem>>, vector<2x8x8x128xf32>
    %58 = vector.extract_strided_slice %15 {offsets = [6, 0, 0], sizes = [1, 1, 128], strides = [1, 1, 1]} : vector<9x1x128xf32> to vector<1x1x128xf32>
    %59 = vector.shape_cast %58 : vector<1x1x128xf32> to vector<1x128xf32>
    %60 = vector.shape_cast %59 : vector<1x128xf32> to vector<1x1x1x128xf32>
    %61 = vector.broadcast %60 : vector<1x1x1x128xf32> to vector<2x8x8x128xf32>
    %62 = arith.mulf %57, %61 : vector<2x8x8x128xf32>
    %63 = arith.addf %56, %62 : vector<2x8x8x128xf32>
    %c0_45 = arith.constant 0 : index
    %c2_46 = arith.constant 2 : index
    %c1_47 = arith.constant 1 : index
    %c0_48 = arith.constant 0 : index
    %64 = vector.load %arg8[%c0_45, %c2_46, %c1_47, %c0_48] : memref<2x10x10x128xf32, #tpu.memory_space<vmem>>, vector<2x8x8x128xf32>
    %65 = vector.extract_strided_slice %15 {offsets = [7, 0, 0], sizes = [1, 1, 128], strides = [1, 1, 1]} : vector<9x1x128xf32> to vector<1x1x128xf32>
    %66 = vector.shape_cast %65 : vector<1x1x128xf32> to vector<1x128xf32>
    %67 = vector.shape_cast %66 : vector<1x128xf32> to vector<1x1x1x128xf32>
    %68 = vector.broadcast %67 : vector<1x1x1x128xf32> to vector<2x8x8x128xf32>
    %69 = arith.mulf %64, %68 : vector<2x8x8x128xf32>
    %70 = arith.addf %63, %69 : vector<2x8x8x128xf32>
    %c0_49 = arith.constant 0 : index
    %c2_50 = arith.constant 2 : index
    %c2_51 = arith.constant 2 : index
    %c0_52 = arith.constant 0 : index
    %71 = vector.load %arg8[%c0_49, %c2_50, %c2_51, %c0_52] : memref<2x10x10x128xf32, #tpu.memory_space<vmem>>, vector<2x8x8x128xf32>
    %72 = vector.extract_strided_slice %15 {offsets = [8, 0, 0], sizes = [1, 1, 128], strides = [1, 1, 1]} : vector<9x1x128xf32> to vector<1x1x128xf32>
    %73 = vector.shape_cast %72 : vector<1x1x128xf32> to vector<1x128xf32>
    %74 = vector.shape_cast %73 : vector<1x128xf32> to vector<1x1x1x128xf32>
    %75 = vector.broadcast %74 : vector<1x1x1x128xf32> to vector<2x8x8x128xf32>
    %76 = arith.mulf %71, %75 : vector<2x8x8x128xf32>
    %77 = arith.addf %70, %76 : vector<2x8x8x128xf32>
    %78 = vector.shape_cast %77 : vector<2x8x8x128xf32> to vector<128x128xf32>
    %79 = arith.truncf %78 : vector<128x128xf32> to vector<128x128xbf16>
    %c0_53 = arith.constant 0 : index
    %c0_54 = arith.constant 0 : index
    %80 = vector.load %arg5[%c0_53, %c0_54] : memref<128x128xbf16, #tpu.memory_space<vmem>>, vector<128x128xbf16>
    %cst_55 = arith.constant dense<0.000000e+00> : vector<128x128xf32>
    %81 = tpu.matmul %79, %80, %cst_55 {dimension_numbers = #tpu.dot_dimension_numbers<[1], [0], [0], [1], [0, 0, 1, 1], [], []>} : vector<128x128xbf16>, vector<128x128xbf16>, vector<128x128xf32> -> vector<128x128xf32>
    %82 = vector.shape_cast %81 : vector<128x128xf32> to vector<2x8x8x128xf32>
    %83 = arith.truncf %82 : vector<2x8x8x128xf32> to vector<2x8x8x128xbf16>
    %c0_56 = arith.constant 0 : index
    %c0_57 = arith.constant 0 : index
    %c0_58 = arith.constant 0 : index
    %c0_59 = arith.constant 0 : index
    %84 = vector.load %arg6[%c0_56, %c0_57, %c0_58, %c0_59] : memref<2x8x8x128xbf16, #tpu.memory_space<vmem>>, vector<2x8x8x128xbf16>
    tpu.vector_store %arg6[%c0_56, %c0_57, %c0_58, %c0_59], %83 {strides = array<i32>} : memref<2x8x8x128xbf16, #tpu.memory_space<vmem>>, vector<2x8x8x128xbf16>,
    %cst_60 = arith.constant dense<0.000000e+00> : vector<128xf32>
    %85 = vector.multi_reduction <add>, %81, %cst_60 [0] : vector<128x128xf32> to vector<128xf32>
    %86 = vector.shape_cast %85 : vector<128xf32> to vector<1x128xf32>
    %87 = arith.mulf %81, %81 : vector<128x128xf32>
    %cst_61 = arith.constant dense<0.000000e+00> : vector<128xf32>
    %88 = vector.multi_reduction <add>, %87, %cst_61 [0] : vector<128x128xf32> to vector<128xf32>
    %89 = vector.shape_cast %88 : vector<128xf32> to vector<1x128xf32>
    %90 = tpu.concatenate %86, %89 in 0 : vector<1x128xf32>, vector<1x128xf32> -> vector<2x128xf32>
    %91 = vector.shape_cast %90 : vector<2x128xf32> to vector<1x2x128xf32>
    %c0_62 = arith.constant 0 : index
    %c0_63 = arith.constant 0 : index
    %c0_64 = arith.constant 0 : index
    %92 = vector.load %arg7[%c0_62, %c0_63, %c0_64] : memref<1x2x128xf32, #tpu.memory_space<vmem>>, vector<1x2x128xf32>
    tpu.vector_store %arg7[%c0_62, %c0_63, %c0_64], %91 {strides = array<i32>} : memref<1x2x128xf32, #tpu.memory_space<vmem>>, vector<1x2x128xf32>,
    return
  }
  func.func @transform_0(%arg0: i32) -> (i32, i32, i32, i32) {
    %c0_i32 = arith.constant 0 : i32
    %c0_i32_0 = arith.constant 0 : i32
    %c0_i32_1 = arith.constant 0 : i32
    %c0_i32_2 = arith.constant 0 : i32
    return %arg0, %c0_i32, %c0_i32_0, %c0_i32_1 : i32, i32, i32, i32
  }
  func.func @transform_1(%arg0: i32) -> (i32, i32) {
    %c0_i32 = arith.constant 0 : i32
    %c0_i32_0 = arith.constant 0 : i32
    %c0_i32_1 = arith.constant 0 : i32
    return %c0_i32, %c0_i32_0 : i32, i32
  }
  func.func @transform_2(%arg0: i32) -> (i32, i32) {
    %c0_i32 = arith.constant 0 : i32
    %c0_i32_0 = arith.constant 0 : i32
    %c0_i32_1 = arith.constant 0 : i32
    return %c0_i32, %c0_i32_0 : i32, i32
  }
  func.func @transform_3(%arg0: i32) -> (i32, i32, i32) {
    %c0_i32 = arith.constant 0 : i32
    %c0_i32_0 = arith.constant 0 : i32
    %c0_i32_1 = arith.constant 0 : i32
    %c0_i32_2 = arith.constant 0 : i32
    return %c0_i32, %c0_i32_0, %c0_i32_1 : i32, i32, i32
  }
  func.func @transform_4(%arg0: i32) -> (i32, i32) {
    %c0_i32 = arith.constant 0 : i32
    %c0_i32_0 = arith.constant 0 : i32
    %c0_i32_1 = arith.constant 0 : i32
    return %c0_i32, %c0_i32_0 : i32, i32
  }
  func.func @transform_5(%arg0: i32) -> (i32, i32, i32, i32) {
    %c0_i32 = arith.constant 0 : i32
    %c0_i32_0 = arith.constant 0 : i32
    %c0_i32_1 = arith.constant 0 : i32
    %c0_i32_2 = arith.constant 0 : i32
    return %arg0, %c0_i32, %c0_i32_0, %c0_i32_1 : i32, i32, i32, i32
  }
  func.func @transform_6(%arg0: i32) -> (i32, i32, i32) {
    %c0_i32 = arith.constant 0 : i32
    %c0_i32_0 = arith.constant 0 : i32
    %c0_i32_1 = arith.constant 0 : i32
    return %arg0, %c0_i32, %c0_i32_0 : i32, i32, i32
  }
}

module attributes {stable_mosaic.version = 11 : i64} {
  func.func @_bn_relu_kernel(%arg0: i32, %arg1: memref<2x8x8x128xbf16, #tpu.memory_space<vmem>>, %arg2: memref<1x128xf32, #tpu.memory_space<vmem>>, %arg3: memref<1x128xf32, #tpu.memory_space<vmem>>, %arg4: memref<2x8x8x128xf32, #tpu.memory_space<vmem>>) attributes {dimension_semantics = [#tpu.dimension_semantics<parallel>], iteration_bounds = array<i64: 1>, scalar_prefetch = 0 : i64, scratch_operands = 0 : i64, tpu.core_type = #tpu.core_type<tc>, window_params = [{transform_indices = @transform_0, window_bounds = array<i64: 2, 8, 8, 128>}, {pipeline_mode = #tpu.pipeline_mode<synchronous>, transform_indices = @transform_1, window_bounds = array<i64: 1, 128>}, {pipeline_mode = #tpu.pipeline_mode<synchronous>, transform_indices = @transform_2, window_bounds = array<i64: 1, 128>}, {transform_indices = @transform_3, window_bounds = array<i64: 2, 8, 8, 128>}]} {
    %c0 = arith.constant 0 : index
    %c0_0 = arith.constant 0 : index
    %c0_1 = arith.constant 0 : index
    %c0_2 = arith.constant 0 : index
    %0 = vector.load %arg1[%c0, %c0_0, %c0_1, %c0_2] : memref<2x8x8x128xbf16, #tpu.memory_space<vmem>>, vector<2x8x8x128xbf16>
    %1 = arith.extf %0 : vector<2x8x8x128xbf16> to vector<2x8x8x128xf32>
    %c0_3 = arith.constant 0 : index
    %c0_4 = arith.constant 0 : index
    %2 = vector.load %arg2[%c0_3, %c0_4] : memref<1x128xf32, #tpu.memory_space<vmem>>, vector<1x128xf32>
    %3 = vector.shape_cast %2 : vector<1x128xf32> to vector<1x1x1x128xf32>
    %4 = vector.broadcast %3 : vector<1x1x1x128xf32> to vector<2x8x8x128xf32>
    %5 = arith.mulf %1, %4 : vector<2x8x8x128xf32>
    %c0_5 = arith.constant 0 : index
    %c0_6 = arith.constant 0 : index
    %6 = vector.load %arg3[%c0_5, %c0_6] : memref<1x128xf32, #tpu.memory_space<vmem>>, vector<1x128xf32>
    %7 = vector.shape_cast %6 : vector<1x128xf32> to vector<1x1x1x128xf32>
    %8 = vector.broadcast %7 : vector<1x1x1x128xf32> to vector<2x8x8x128xf32>
    %9 = arith.addf %5, %8 : vector<2x8x8x128xf32>
    %cst = arith.constant 0.000000e+00 : f32
    %10 = vector.broadcast %cst : f32 to vector<2x8x8x128xf32>
    %11 = arith.maximumf %9, %10 : vector<2x8x8x128xf32>
    %c0_7 = arith.constant 0 : index
    %c0_8 = arith.constant 0 : index
    %c0_9 = arith.constant 0 : index
    %c0_10 = arith.constant 0 : index
    %12 = vector.load %arg4[%c0_7, %c0_8, %c0_9, %c0_10] : memref<2x8x8x128xf32, #tpu.memory_space<vmem>>, vector<2x8x8x128xf32>
    tpu.vector_store %arg4[%c0_7, %c0_8, %c0_9, %c0_10], %11 {strides = array<i32>} : memref<2x8x8x128xf32, #tpu.memory_space<vmem>>, vector<2x8x8x128xf32>,
    return
  }
  func.func @transform_0(%arg0: i32) -> (i32, i32, i32, i32) {
    %c0_i32 = arith.constant 0 : i32
    %c0_i32_0 = arith.constant 0 : i32
    %c0_i32_1 = arith.constant 0 : i32
    %c0_i32_2 = arith.constant 0 : i32
    return %arg0, %c0_i32, %c0_i32_0, %c0_i32_1 : i32, i32, i32, i32
  }
  func.func @transform_1(%arg0: i32) -> (i32, i32) {
    %c0_i32 = arith.constant 0 : i32
    %c0_i32_0 = arith.constant 0 : i32
    %c0_i32_1 = arith.constant 0 : i32
    return %c0_i32, %c0_i32_0 : i32, i32
  }
  func.func @transform_2(%arg0: i32) -> (i32, i32) {
    %c0_i32 = arith.constant 0 : i32
    %c0_i32_0 = arith.constant 0 : i32
    %c0_i32_1 = arith.constant 0 : i32
    return %c0_i32, %c0_i32_0 : i32, i32
  }
  func.func @transform_3(%arg0: i32) -> (i32, i32, i32, i32) {
    %c0_i32 = arith.constant 0 : i32
    %c0_i32_0 = arith.constant 0 : i32
    %c0_i32_1 = arith.constant 0 : i32
    %c0_i32_2 = arith.constant 0 : i32
    return %arg0, %c0_i32, %c0_i32_0, %c0_i32_1 : i32, i32, i32, i32
  }
}

</mosaic_0001>

<llo_original>
// kernel: sep_conv_forward.5
$region0: #{sep_conv_forward.5}
  #allocation0 [shape = 'u32[]', space=smem, size = 0x4, offset = 0x4, fixed_abs, tag = 'smem constant byte address 0x4 - core index']
  #allocation1 [shape = 'u32[144,128]{1,0:T(1,128)}', space=vmem, size = 0x12000, scoped, tag = 'internal scratch']
  %s0 = inlined_call_operand.vmem [shape: bf16[2,8,8,128], index: 0, kind: input, shape index: {}]
  %s1 = inlined_call_operand.vmem [shape: f32[1,128], index: 1, kind: input, shape index: {}]
  %s2 = inlined_call_operand.vmem [shape: f32[1,128], index: 2, kind: input, shape index: {}]
  %s3 = inlined_call_operand.vmem [shape: f32[2,8,8,128], index: 3, kind: output, shape index: {}]
  %s4 = sld [smem:[#allocation0]]
  $region22: #{sep_conv_forward.5} parent=0
    _
  %s6 = ssub.s32 1, %s4
  %s7 = scalar_select 0, %s6, %s4
  // Predicated region
  $region2: #{sep_conv_forward.5} parent=0 // pred_check
    _
  $region3: #{sep_conv_forward.5} parent=0 // pred_check_branch
    %9 = sbr.rel (0) target = $region5
  $region4: #{sep_conv_forward.5} parent=0 // pred_region
    _
  $region5: #{sep_conv_forward.5} parent=0 // pred_fallthru
    _
  // Predicated region
  $region6: #{sep_conv_forward.5} parent=0 // pred_check
    _
  $region7: #{sep_conv_forward.5} parent=0 // pred_check_branch
    %11 = sbr.rel (0) target = $region9
  $region8: #{sep_conv_forward.5} parent=0 // pred_region
    _
  $region9: #{sep_conv_forward.5} parent=0 // pred_fallthru
    _
  // Predicated region
  $region10: #{sep_conv_forward.5} parent=0 // pred_check
    _
  $region11: #{sep_conv_forward.5} parent=0 // pred_check_branch
    %13 = sbr.rel (0) target = $region13
  $region12: #{sep_conv_forward.5} parent=0 // pred_region
    _
  $region13: #{sep_conv_forward.5} parent=0 // pred_fallthru
    _
  %v14 = vld [vmem:[%s0] sm:$0xf]
  %v15 = vld [vmem:[%s0 + $0x4] sm:$0xf]
  %v16 = vld [vmem:[%s0 + $0x8] sm:$0xf]
  %v17 = vld [vmem:[%s0 + $0xc] sm:$0xf]
  %v18 = vld [vmem:[%s0 + $0x10] sm:$0xf]
  %v19 = vld [vmem:[%s0 + $0x14] sm:$0xf]
  %v20 = vld [vmem:[%s0 + $0x18] sm:$0xf]
  %v21 = vld [vmem:[%s0 + $0x1c] sm:$0xf]
  %v22 = vld [vmem:[%s0 + $0x20] sm:$0xf]
  %v23 = vld [vmem:[%s0 + $0x24] sm:$0xf]
  %v24 = vld [vmem:[%s0 + $0x28] sm:$0xf]
  %v25 = vld [vmem:[%s0 + $0x2c] sm:$0xf]
  %v26 = vld [vmem:[%s0 + $0x30] sm:$0xf]
  %v27 = vld [vmem:[%s0 + $0x34] sm:$0xf]
  %v28 = vld [vmem:[%s0 + $0x38] sm:$0xf]
  %v29 = vld [vmem:[%s0 + $0x3c] sm:$0xf]
  %v30 = vunpack.c.l.bf16 %v14
  %v31 = vunpack.c.l.bf16 %v15
  %v32 = vunpack.c.l.bf16 %v16
  %v33 = vunpack.c.l.bf16 %v17
  %v34 = vunpack.c.l.bf16 %v18
  %v35 = vunpack.c.l.bf16 %v19
  %v36 = vunpack.c.l.bf16 %v20
  %v37 = vunpack.c.l.bf16 %v21
  %v38 = vunpack.c.l.bf16 %v22
  %v39 = vunpack.c.l.bf16 %v23
  %v40 = vunpack.c.l.bf16 %v24
  %v41 = vunpack.c.l.bf16 %v25
  %v42 = vunpack.c.l.bf16 %v26
  %v43 = vunpack.c.l.bf16 %v27
  %v44 = vunpack.c.l.bf16 %v28
  %v45 = vunpack.c.l.bf16 %v29
  %v46 = vld [vmem:[%s1] sm:$0x1]
  %v48 = vlaneseq
  %v49 = vshrl.u32 %v48, 7
  %v50 = vsub.s32 0, %v49
  %v51 = vrot.slane %v46, %v50
  %v53 = vmul.f32 %v30, %v51
  %v54 = vmul.f32 %v31, %v51
  %v55 = vmul.f32 %v32, %v51
  %v56 = vmul.f32 %v33, %v51
  %v57 = vmul.f32 %v34, %v51
  %v58 = vmul.f32 %v35, %v51
  %v59 = vmul.f32 %v36, %v51
  %v60 = vmul.f32 %v37, %v51
  %v61 = vmul.f32 %v38, %v51
  %v62 = vmul.f32 %v39, %v51
  %v63 = vmul.f32 %v40, %v51
  %v64 = vmul.f32 %v41, %v51
  %v65 = vmul.f32 %v42, %v51
  %v66 = vmul.f32 %v43, %v51
  %v67 = vmul.f32 %v44, %v51
  %v68 = vmul.f32 %v45, %v51
  %v69 = vld [vmem:[%s2] sm:$0x1]
  %v71 = vlaneseq
  %v72 = vshrl.u32 %v71, 7
  %v73 = vsub.s32 0, %v72
  %v74 = vrot.slane %v69, %v73
  %v76 = vadd.f32 %v53, %v74
  %v77 = vadd.f32 %v54, %v74
  %v78 = vadd.f32 %v55, %v74
  %v79 = vadd.f32 %v56, %v74
  %v80 = vadd.f32 %v57, %v74
  %v81 = vadd.f32 %v58, %v74
  %v82 = vadd.f32 %v59, %v74
  %v83 = vadd.f32 %v60, %v74
  %v84 = vadd.f32 %v61, %v74
  %v85 = vadd.f32 %v62, %v74
  %v86 = vadd.f32 %v63, %v74
  %v87 = vadd.f32 %v64, %v74
  %v88 = vadd.f32 %v65, %v74
  %v89 = vadd.f32 %v66, %v74
  %v90 = vadd.f32 %v67, %v74
  %v91 = vadd.f32 %v68, %v74
  %v92 = vmax.f32 %v76, 0.0
  %v93 = vmax.f32 %v77, 0.0
  %v94 = vmax.f32 %v78, 0.0
  %v95 = vmax.f32 %v79, 0.0
  %v96 = vmax.f32 %v80, 0.0
  %v97 = vmax.f32 %v81, 0.0
  %v98 = vmax.f32 %v82, 0.0
  %v99 = vmax.f32 %v83, 0.0
  %v100 = vmax.f32 %v84, 0.0
  %v101 = vmax.f32 %v85, 0.0
  %v102 = vmax.f32 %v86, 0.0
  %v103 = vmax.f32 %v87, 0.0
  %v104 = vmax.f32 %v88, 0.0
  %v105 = vmax.f32 %v89, 0.0
  %v106 = vmax.f32 %v90, 0.0
  %v107 = vmax.f32 %v91, 0.0
  %108 = vst [vmem:[%s3] sm:$0xff] %v92
  %109 = vst [vmem:[%s3 + $0x8] sm:$0xff] %v93
  %110 = vst [vmem:[%s3 + $0x10] sm:$0xff] %v94
  %111 = vst [vmem:[%s3 + $0x18] sm:$0xff] %v95
  %112 = vst [vmem:[%s3 + $0x20] sm:$0xff] %v96
  %113 = vst [vmem:[%s3 + $0x28] sm:$0xff] %v97
  %114 = vst [vmem:[%s3 + $0x30] sm:$0xff] %v98
  %115 = vst [vmem:[%s3 + $0x38] sm:$0xff] %v99
  %116 = vst [vmem:[%s3 + $0x40] sm:$0xff] %v100
  %117 = vst [vmem:[%s3 + $0x48] sm:$0xff] %v101
  %118 = vst [vmem:[%s3 + $0x50] sm:$0xff] %v102
  %119 = vst [vmem:[%s3 + $0x58] sm:$0xff] %v103
  %120 = vst [vmem:[%s3 + $0x60] sm:$0xff] %v104
  %121 = vst [vmem:[%s3 + $0x68] sm:$0xff] %v105
  %122 = vst [vmem:[%s3 + $0x70] sm:$0xff] %v106
  %123 = vst [vmem:[%s3 + $0x78] sm:$0xff] %v107
  // Predicated region
  $region14: #{sep_conv_forward.5} parent=0 // pred_check
    _
  $region15: #{sep_conv_forward.5} parent=0 // pred_check_branch
    %125 = sbr.rel (0) target = $region17
  $region16: #{sep_conv_forward.5} parent=0 // pred_region
    _
  $region17: #{sep_conv_forward.5} parent=0 // pred_fallthru
    _
  // Predicated region
  $region18: #{sep_conv_forward.5} parent=0 // pred_check
    _
  $region19: #{sep_conv_forward.5} parent=0 // pred_check_branch
    %127 = sbr.rel (0) target = $region21
  $region20: #{sep_conv_forward.5} parent=0 // pred_region
    _
  $region21: #{sep_conv_forward.5} parent=0 // pred_fallthru
    _

// kernel: sep_conv_forward.4
$region0: #{sep_conv_forward.4}
  #allocation0 [shape = 'u32[]', space=smem, size = 0x4, offset = 0x4, fixed_abs, tag = 'smem constant byte address 0x4 - core index']
  #allocation1 [shape = 'u32[144,128]{1,0:T(1,128)}', space=vmem, size = 0x12000, scoped, tag = 'internal scratch']
  #allocation2 [shape = 'f32[2,10,10,128]{3,2,1,0:T(8,128)}', space=vmem, size = 0x28000, scoped, tag = 'scratch operand']
  %s0 = inlined_call_operand.vmem [shape: bf16[2,8,8,128], index: 0, kind: input, shape index: {}]
  %s1 = inlined_call_operand.vmem [shape: f32[1,128], index: 1, kind: input, shape index: {}]
  %s2 = inlined_call_operand.vmem [shape: f32[1,128], index: 2, kind: input, shape index: {}]
  %s3 = inlined_call_operand.vmem [shape: f32[9,1,128], index: 3, kind: input, shape index: {}]
  %s4 = inlined_call_operand.vmem [shape: bf16[128,128], index: 4, kind: input, shape index: {}]
  %s5 = inlined_call_operand.vmem [shape: bf16[2,8,8,128], index: 5, kind: output, shape index: {0}]
  %s6 = inlined_call_operand.vmem [shape: f32[1,2,128], index: 6, kind: output, shape index: {1}]
  %7 = xla_tuple %s5, %s6
  %s8 = sld [smem:[#allocation0]]
  $region38: #{sep_conv_forward.4} parent=0
    _
  %s10 = ssub.s32 1, %s8
  %s11 = scalar_select 0, %s10, %s8
  // Predicated region
  $region2: #{sep_conv_forward.4} parent=0 // pred_check
    _
  $region3: #{sep_conv_forward.4} parent=0 // pred_check_branch
    %13 = sbr.rel (0) target = $region5
  $region4: #{sep_conv_forward.4} parent=0 // pred_region
    _
  $region5: #{sep_conv_forward.4} parent=0 // pred_fallthru
    _
  // Predicated region
  $region6: #{sep_conv_forward.4} parent=0 // pred_check
    _
  $region7: #{sep_conv_forward.4} parent=0 // pred_check_branch
    %15 = sbr.rel (0) target = $region9
  $region8: #{sep_conv_forward.4} parent=0 // pred_region
    _
  $region9: #{sep_conv_forward.4} parent=0 // pred_fallthru
    _
  // Predicated region
  $region10: #{sep_conv_forward.4} parent=0 // pred_check
    _
  $region11: #{sep_conv_forward.4} parent=0 // pred_check_branch
    %17 = sbr.rel (0) target = $region13
  $region12: #{sep_conv_forward.4} parent=0 // pred_region
    _
  $region13: #{sep_conv_forward.4} parent=0 // pred_fallthru
    _
  // Predicated region
  $region14: #{sep_conv_forward.4} parent=0 // pred_check
    _
  $region15: #{sep_conv_forward.4} parent=0 // pred_check_branch
    %19 = sbr.rel (0) target = $region17
  $region16: #{sep_conv_forward.4} parent=0 // pred_region
    _
  $region17: #{sep_conv_forward.4} parent=0 // pred_fallthru
    _
  // Predicated region
  $region18: #{sep_conv_forward.4} parent=0 // pred_check
    _
  $region19: #{sep_conv_forward.4} parent=0 // pred_check_branch
    %21 = sbr.rel (0) target = $region21
  $region20: #{sep_conv_forward.4} parent=0 // pred_region
    _
  $region21: #{sep_conv_forward.4} parent=0 // pred_fallthru
    _
  %v23 = vld [vmem:[%s0] sm:$0xf]
  %v24 = vld [vmem:[%s0 + $0x4] sm:$0xf]
  %v25 = vld [vmem:[%s0 + $0x8] sm:$0xf]
  %v26 = vld [vmem:[%s0 + $0xc] sm:$0xf]
  %v27 = vld [vmem:[%s0 + $0x10] sm:$0xf]
  %v28 = vld [vmem:[%s0 + $0x14] sm:$0xf]
  %v29 = vld [vmem:[%s0 + $0x18] sm:$0xf]
  %v30 = vld [vmem:[%s0 + $0x1c] sm:$0xf]
  %v31 = vld [vmem:[%s0 + $0x20] sm:$0xf]
  %v32 = vld [vmem:[%s0 + $0x24] sm:$0xf]
  %v33 = vld [vmem:[%s0 + $0x28] sm:$0xf]
  %v34 = vld [vmem:[%s0 + $0x2c] sm:$0xf]
  %v35 = vld [vmem:[%s0 + $0x30] sm:$0xf]
  %v36 = vld [vmem:[%s0 + $0x34] sm:$0xf]
  %v37 = vld [vmem:[%s0 + $0x38] sm:$0xf]
  %v38 = vld [vmem:[%s0 + $0x3c] sm:$0xf]
  %v39 = vunpack.c.l.bf16 %v23
  %v40 = vunpack.c.l.bf16 %v24
  %v41 = vunpack.c.l.bf16 %v25
  %v42 = vunpack.c.l.bf16 %v26
  %v43 = vunpack.c.l.bf16 %v27
  %v44 = vunpack.c.l.bf16 %v28
  %v45 = vunpack.c.l.bf16 %v29
  %v46 = vunpack.c.l.bf16 %v30
  %v47 = vunpack.c.l.bf16 %v31
  %v48 = vunpack.c.l.bf16 %v32
  %v49 = vunpack.c.l.bf16 %v33
  %v50 = vunpack.c.l.bf16 %v34
  %v51 = vunpack.c.l.bf16 %v35
  %v52 = vunpack.c.l.bf16 %v36
  %v53 = vunpack.c.l.bf16 %v37
  %v54 = vunpack.c.l.bf16 %v38
  %v55 = vld [vmem:[%s1] sm:$0x1]
  %v57 = vlaneseq
  %v58 = vshrl.u32 %v57, 7
  %v59 = vsub.s32 0, %v58
  %v60 = vrot.slane %v55, %v59
  %v62 = vmul.f32 %v39, %v60
  %v63 = vmul.f32 %v40, %v60
  %v64 = vmul.f32 %v41, %v60
  %v65 = vmul.f32 %v42, %v60
  %v66 = vmul.f32 %v43, %v60
  %v67 = vmul.f32 %v44, %v60
  %v68 = vmul.f32 %v45, %v60
  %v69 = vmul.f32 %v46, %v60
  %v70 = vmul.f32 %v47, %v60
  %v71 = vmul.f32 %v48, %v60
  %v72 = vmul.f32 %v49, %v60
  %v73 = vmul.f32 %v50, %v60
  %v74 = vmul.f32 %v51, %v60
  %v75 = vmul.f32 %v52, %v60
  %v76 = vmul.f32 %v53, %v60
  %v77 = vmul.f32 %v54, %v60
  %v78 = vld [vmem:[%s2] sm:$0x1]
  %v80 = vlaneseq
  %v81 = vshrl.u32 %v80, 7
  %v82 = vsub.s32 0, %v81
  %v83 = vrot.slane %v78, %v82
  %v85 = vadd.f32 %v62, %v83
  %v86 = vadd.f32 %v63, %v83
  %v87 = vadd.f32 %v64, %v83
  %v88 = vadd.f32 %v65, %v83
  %v89 = vadd.f32 %v66, %v83
  %v90 = vadd.f32 %v67, %v83
  %v91 = vadd.f32 %v68, %v83
  %v92 = vadd.f32 %v69, %v83
  %v93 = vadd.f32 %v70, %v83
  %v94 = vadd.f32 %v71, %v83
  %v95 = vadd.f32 %v72, %v83
  %v96 = vadd.f32 %v73, %v83
  %v97 = vadd.f32 %v74, %v83
  %v98 = vadd.f32 %v75, %v83
  %v99 = vadd.f32 %v76, %v83
  %v100 = vadd.f32 %v77, %v83
  %v101 = vmax.f32 %v85, 0.0
  %v102 = vmax.f32 %v86, 0.0
  %v103 = vmax.f32 %v87, 0.0
  %v104 = vmax.f32 %v88, 0.0
  %v105 = vmax.f32 %v89, 0.0
  %v106 = vmax.f32 %v90, 0.0
  %v107 = vmax.f32 %v91, 0.0
  %v108 = vmax.f32 %v92, 0.0
  %v109 = vmax.f32 %v93, 0.0
  %v110 = vmax.f32 %v94, 0.0
  %v111 = vmax.f32 %v95, 0.0
  %v112 = vmax.f32 %v96, 0.0
  %v113 = vmax.f32 %v97, 0.0
  %v114 = vmax.f32 %v98, 0.0
  %v115 = vmax.f32 %v99, 0.0
  %v116 = vmax.f32 %v100, 0.0
  %117 = vst [vmem:[#allocation2] sm:$0xff] 0.0
  %118 = vst [vmem:[#allocation2 + $0x8] sm:$0x3] 0.0
  %119 = vst [vmem:[#allocation2 + $0x10] sm:$0xff] 0.0
  %120 = vst [vmem:[#allocation2 + $0x18] sm:$0x3] 0.0
  %121 = vst [vmem:[#allocation2 + $0x20] sm:$0xff] 0.0
  %122 = vst [vmem:[#allocation2 + $0x28] sm:$0x3] 0.0
  %123 = vst [vmem:[#allocation2 + $0x30] sm:$0xff] 0.0
  %124 = vst [vmem:[#allocation2 + $0x38] sm:$0x3] 0.0
  %125 = vst [vmem:[#allocation2 + $0x40] sm:$0xff] 0.0
  %126 = vst [vmem:[#allocation2 + $0x48] sm:$0x3] 0.0
  %127 = vst [vmem:[#allocation2 + $0x50] sm:$0xff] 0.0
  %128 = vst [vmem:[#allocation2 + $0x58] sm:$0x3] 0.0
  %129 = vst [vmem:[#allocation2 + $0x60] sm:$0xff] 0.0
  %130 = vst [vmem:[#allocation2 + $0x68] sm:$0x3] 0.0
  %131 = vst [vmem:[#allocation2 + $0x70] sm:$0xff] 0.0
  %132 = vst [vmem:[#allocation2 + $0x78] sm:$0x3] 0.0
  %133 = vst [vmem:[#allocation2 + $0x80] sm:$0xff] 0.0
  %134 = vst [vmem:[#allocation2 + $0x88] sm:$0x3] 0.0
  %135 = vst [vmem:[#allocation2 + $0x90] sm:$0xff] 0.0
  %136 = vst [vmem:[#allocation2 + $0x98] sm:$0x3] 0.0
  %137 = vst [vmem:[#allocation2 + $0xa0] sm:$0xff] 0.0
  %138 = vst [vmem:[#allocation2 + $0xa8] sm:$0x3] 0.0
  %139 = vst [vmem:[#allocation2 + $0xb0] sm:$0xff] 0.0
  %140 = vst [vmem:[#allocation2 + $0xb8] sm:$0x3] 0.0
  %141 = vst [vmem:[#allocation2 + $0xc0] sm:$0xff] 0.0
  %142 = vst [vmem:[#allocation2 + $0xc8] sm:$0x3] 0.0
  %143 = vst [vmem:[#allocation2 + $0xd0] sm:$0xff] 0.0
  %144 = vst [vmem:[#allocation2 + $0xd8] sm:$0x3] 0.0
  %145 = vst [vmem:[#allocation2 + $0xe0] sm:$0xff] 0.0
  %146 = vst [vmem:[#allocation2 + $0xe8] sm:$0x3] 0.0
  %147 = vst [vmem:[#allocation2 + $0xf0] sm:$0xff] 0.0
  %148 = vst [vmem:[#allocation2 + $0xf8] sm:$0x3] 0.0
  %149 = vst [vmem:[#allocation2 + $0x100] sm:$0xff] 0.0
  %150 = vst [vmem:[#allocation2 + $0x108] sm:$0x3] 0.0
  %151 = vst [vmem:[#allocation2 + $0x110] sm:$0xff] 0.0
  %152 = vst [vmem:[#allocation2 + $0x118] sm:$0x3] 0.0
  %153 = vst [vmem:[#allocation2 + $0x120] sm:$0xff] 0.0
  %154 = vst [vmem:[#allocation2 + $0x128] sm:$0x3] 0.0
  %155 = vst [vmem:[#allocation2 + $0x130] sm:$0xff] 0.0
  %156 = vst [vmem:[#allocation2 + $0x138] sm:$0x3] 0.0
  %s157 = scalar_lea.vmem [#allocation2], 16
  %158 = vst [vmem:[%s157 + $0x1] sm:$0xff] %v101
  %159 = vst [vmem:[%s157 + $0x11] sm:$0xff] %v102
  %160 = vst [vmem:[%s157 + $0x21] sm:$0xff] %v103
  %161 = vst [vmem:[%s157 + $0x31] sm:$0xff] %v104
  %162 = vst [vmem:[%s157 + $0x41] sm:$0xff] %v105
  %163 = vst [vmem:[%s157 + $0x51] sm:$0xff] %v106
  %164 = vst [vmem:[%s157 + $0x61] sm:$0xff] %v107
  %165 = vst [vmem:[%s157 + $0x71] sm:$0xff] %v108
  %166 = vst [vmem:[%s157 + $0xa1] sm:$0xff] %v109
  %167 = vst [vmem:[%s157 + $0xb1] sm:$0xff] %v110
  %168 = vst [vmem:[%s157 + $0xc1] sm:$0xff] %v111
  %169 = vst [vmem:[%s157 + $0xd1] sm:$0xff] %v112
  %170 = vst [vmem:[%s157 + $0xe1] sm:$0xff] %v113
  %171 = vst [vmem:[%s157 + $0xf1] sm:$0xff] %v114
  %172 = vst [vmem:[%s157 + $0x101] sm:$0xff] %v115
  %173 = vst [vmem:[%s157 + $0x111] sm:$0xff] %v116
  %v174 = vld [vmem:[%s3] sm:$0x1]
  %v175 = vld [vmem:[%s3 + $0x1] sm:$0x1]
  %v176 = vld [vmem:[%s3 + $0x2] sm:$0x1]
  %v177 = vld [vmem:[%s3 + $0x3] sm:$0x1]
  %v178 = vld [vmem:[%s3 + $0x4] sm:$0x1]
  %v179 = vld [vmem:[%s3 + $0x5] sm:$0x1]
  %v180 = vld [vmem:[%s3 + $0x6] sm:$0x1]
  %v181 = vld [vmem:[%s3 + $0x7] sm:$0x1]
  %v182 = vld [vmem:[%s3 + $0x8] sm:$0x1]
  %v183 = vld [vmem:[#allocation2] sm:$0xff]
  %v184 = vld [vmem:[#allocation2 + $0x10] sm:$0xff]
  %v185 = vld [vmem:[#allocation2 + $0x20] sm:$0xff]
  %v186 = vld [vmem:[#allocation2 + $0x30] sm:$0xff]
  %v187 = vld [vmem:[#allocation2 + $0x40] sm:$0xff]
  %v188 = vld [vmem:[#allocation2 + $0x50] sm:$0xff]
  %v189 = vld [vmem:[#allocation2 + $0x60] sm:$0xff]
  %v190 = vld [vmem:[#allocation2 + $0x70] sm:$0xff]
  %v191 = vld [vmem:[#allocation2 + $0xa0] sm:$0xff]
  %v192 = vld [vmem:[#allocation2 + $0xb0] sm:$0xff]
  %v193 = vld [vmem:[#allocation2 + $0xc0] sm:$0xff]
  %v194 = vld [vmem:[#allocation2 + $0xd0] sm:$0xff]
  %v195 = vld [vmem:[#allocation2 + $0xe0] sm:$0xff]
  %v196 = vld [vmem:[#allocation2 + $0xf0] sm:$0xff]
  %v197 = vld [vmem:[#allocation2 + $0x100] sm:$0xff]
  %v198 = vld [vmem:[#allocation2 + $0x110] sm:$0xff]
  %v200 = vlaneseq
  %v201 = vshrl.u32 %v200, 7
  %v202 = vsub.s32 0, %v201
  %v203 = vrot.slane %v174, %v202
  %v205 = vmul.f32 %v183, %v203
  %v206 = vmul.f32 %v184, %v203
  %v207 = vmul.f32 %v185, %v203
  %v208 = vmul.f32 %v186, %v203
  %v209 = vmul.f32 %v187, %v203
  %v210 = vmul.f32 %v188, %v203
  %v211 = vmul.f32 %v189, %v203
  %v212 = vmul.f32 %v190, %v203
  %v213 = vmul.f32 %v191, %v203
  %v214 = vmul.f32 %v192, %v203
  %v215 = vmul.f32 %v193, %v203
  %v216 = vmul.f32 %v194, %v203
  %v217 = vmul.f32 %v195, %v203
  %v218 = vmul.f32 %v196, %v203
  %v219 = vmul.f32 %v197, %v203
  %v220 = vmul.f32 %v198, %v203
  %v221 = vld [vmem:[#allocation2 + $0x1] sm:$0xff]
  %v222 = vld [vmem:[#allocation2 + $0x11] sm:$0xff]
  %v223 = vld [vmem:[#allocation2 + $0x21] sm:$0xff]
  %v224 = vld [vmem:[#allocation2 + $0x31] sm:$0xff]
  %v225 = vld [vmem:[#allocation2 + $0x41] sm:$0xff]
  %v226 = vld [vmem:[#allocation2 + $0x51] sm:$0xff]
  %v227 = vld [vmem:[#allocation2 + $0x61] sm:$0xff]
  %v228 = vld [vmem:[#allocation2 + $0x71] sm:$0xff]
  %v229 = vld [vmem:[#allocation2 + $0xa1] sm:$0xff]
  %v230 = vld [vmem:[#allocation2 + $0xb1] sm:$0xff]
  %v231 = vld [vmem:[#allocation2 + $0xc1] sm:$0xff]
  %v232 = vld [vmem:[#allocation2 + $0xd1] sm:$0xff]
  %v233 = vld [vmem:[#allocation2 + $0xe1] sm:$0xff]
  %v234 = vld [vmem:[#allocation2 + $0xf1] sm:$0xff]
  %v235 = vld [vmem:[#allocation2 + $0x101] sm:$0xff]
  %v236 = vld [vmem:[#allocation2 + $0x111] sm:$0xff]
  %v238 = vlaneseq
  %v239 = vshrl.u32 %v238, 7
  %v240 = vsub.s32 0, %v239
  %v241 = vrot.slane %v175, %v240
  %v243 = vmul.f32 %v221, %v241
  %v244 = vmul.f32 %v222, %v241
  %v245 = vmul.f32 %v223, %v241
  %v246 = vmul.f32 %v224, %v241
  %v247 = vmul.f32 %v225, %v241
  %v248 = vmul.f32 %v226, %v241
  %v249 = vmul.f32 %v227, %v241
  %v250 = vmul.f32 %v228, %v241
  %v251 = vmul.f32 %v229, %v241
  %v252 = vmul.f32 %v230, %v241
  %v253 = vmul.f32 %v231, %v241
  %v254 = vmul.f32 %v232, %v241
  %v255 = vmul.f32 %v233, %v241
  %v256 = vmul.f32 %v234, %v241
  %v257 = vmul.f32 %v235, %v241
  %v258 = vmul.f32 %v236, %v241
  %v259 = vadd.f32 %v205, %v243
  %v260 = vadd.f32 %v206, %v244
  %v261 = vadd.f32 %v207, %v245
  %v262 = vadd.f32 %v208, %v246
  %v263 = vadd.f32 %v209, %v247
  %v264 = vadd.f32 %v210, %v248
  %v265 = vadd.f32 %v211, %v249
  %v266 = vadd.f32 %v212, %v250
  %v267 = vadd.f32 %v213, %v251
  %v268 = vadd.f32 %v214, %v252
  %v269 = vadd.f32 %v215, %v253
  %v270 = vadd.f32 %v216, %v254
  %v271 = vadd.f32 %v217, %v255
  %v272 = vadd.f32 %v218, %v256
  %v273 = vadd.f32 %v219, %v257
  %v274 = vadd.f32 %v220, %v258
  %v275 = vld [vmem:[#allocation2 + $0x2] sm:$0xff]
  %v276 = vld [vmem:[#allocation2 + $0x12] sm:$0xff]
  %v277 = vld [vmem:[#allocation2 + $0x22] sm:$0xff]
  %v278 = vld [vmem:[#allocation2 + $0x32] sm:$0xff]
  %v279 = vld [vmem:[#allocation2 + $0x42] sm:$0xff]
  %v280 = vld [vmem:[#allocation2 + $0x52] sm:$0xff]
  %v281 = vld [vmem:[#allocation2 + $0x62] sm:$0xff]
  %v282 = vld [vmem:[#allocation2 + $0x72] sm:$0xff]
  %v283 = vld [vmem:[#allocation2 + $0xa2] sm:$0xff]
  %v284 = vld [vmem:[#allocation2 + $0xb2] sm:$0xff]
  %v285 = vld [vmem:[#allocation2 + $0xc2] sm:$0xff]
  %v286 = vld [vmem:[#allocation2 + $0xd2] sm:$0xff]
  %v287 = vld [vmem:[#allocation2 + $0xe2] sm:$0xff]
  %v288 = vld [vmem:[#allocation2 + $0xf2] sm:$0xff]
  %v289 = vld [vmem:[#allocation2 + $0x102] sm:$0xff]
  %v290 = vld [vmem:[#allocation2 + $0x112] sm:$0xff]
  %v292 = vlaneseq
  %v293 = vshrl.u32 %v292, 7
  %v294 = vsub.s32 0, %v293
  %v295 = vrot.slane %v176, %v294
  %v297 = vmul.f32 %v275, %v295
  %v298 = vmul.f32 %v276, %v295
  %v299 = vmul.f32 %v277, %v295
  %v300 = vmul.f32 %v278, %v295
  %v301 = vmul.f32 %v279, %v295
  %v302 = vmul.f32 %v280, %v295
  %v303 = vmul.f32 %v281, %v295
  %v304 = vmul.f32 %v282, %v295
  %v305 = vmul.f32 %v283, %v295
  %v306 = vmul.f32 %v284, %v295
  %v307 = vmul.f32 %v285, %v295
  %v308 = vmul.f32 %v286, %v295
  %v309 = vmul.f32 %v287, %v295
  %v310 = vmul.f32 %v288, %v295
  %v311 = vmul.f32 %v289, %v295
  %v312 = vmul.f32 %v290, %v295
  %v313 = vadd.f32 %v259, %v297
  %v314 = vadd.f32 %v260, %v298
  %v315 = vadd.f32 %v261, %v299
  %v316 = vadd.f32 %v262, %v300
  %v317 = vadd.f32 %v263, %v301
  %v318 = vadd.f32 %v264, %v302
  %v319 = vadd.f32 %v265, %v303
  %v320 = vadd.f32 %v266, %v304
  %v321 = vadd.f32 %v267, %v305
  %v322 = vadd.f32 %v268, %v306
  %v323 = vadd.f32 %v269, %v307
  %v324 = vadd.f32 %v270, %v308
  %v325 = vadd.f32 %v271, %v309
  %v326 = vadd.f32 %v272, %v310
  %v327 = vadd.f32 %v273, %v311
  %v328 = vadd.f32 %v274, %v312
  %v329 = vld [vmem:[%s157] sm:$0xff]
  %v330 = vld [vmem:[%s157 + $0x10] sm:$0xff]
  %v331 = vld [vmem:[%s157 + $0x20] sm:$0xff]
  %v332 = vld [vmem:[%s157 + $0x30] sm:$0xff]
  %v333 = vld [vmem:[%s157 + $0x40] sm:$0xff]
  %v334 = vld [vmem:[%s157 + $0x50] sm:$0xff]
  %v335 = vld [vmem:[%s157 + $0x60] sm:$0xff]
  %v336 = vld [vmem:[%s157 + $0x70] sm:$0xff]
  %v337 = vld [vmem:[%s157 + $0xa0] sm:$0xff]
  %v338 = vld [vmem:[%s157 + $0xb0] sm:$0xff]
  %v339 = vld [vmem:[%s157 + $0xc0] sm:$0xff]
  %v340 = vld [vmem:[%s157 + $0xd0] sm:$0xff]
  %v341 = vld [vmem:[%s157 + $0xe0] sm:$0xff]
  %v342 = vld [vmem:[%s157 + $0xf0] sm:$0xff]
  %v343 = vld [vmem:[%s157 + $0x100] sm:$0xff]
  %v344 = vld [vmem:[%s157 + $0x110] sm:$0xff]
  %v346 = vlaneseq
  %v347 = vshrl.u32 %v346, 7
  %v348 = vsub.s32 0, %v347
  %v349 = vrot.slane %v177, %v348
  %v351 = vmul.f32 %v329, %v349
  %v352 = vmul.f32 %v330, %v349
  %v353 = vmul.f32 %v331, %v349
  %v354 = vmul.f32 %v332, %v349
  %v355 = vmul.f32 %v333, %v349
  %v356 = vmul.f32 %v334, %v349
  %v357 = vmul.f32 %v335, %v349
  %v358 = vmul.f32 %v336, %v349
  %v359 = vmul.f32 %v337, %v349
  %v360 = vmul.f32 %v338, %v349
  %v361 = vmul.f32 %v339, %v349
  %v362 = vmul.f32 %v340, %v349
  %v363 = vmul.f32 %v341, %v349
  %v364 = vmul.f32 %v342, %v349
  %v365 = vmul.f32 %v343, %v349
  %v366 = vmul.f32 %v344, %v349
  %v367 = vadd.f32 %v313, %v351
  %v368 = vadd.f32 %v314, %v352
  %v369 = vadd.f32 %v315, %v353
  %v370 = vadd.f32 %v316, %v354
  %v371 = vadd.f32 %v317, %v355
  %v372 = vadd.f32 %v318, %v356
  %v373 = vadd.f32 %v319, %v357
  %v374 = vadd.f32 %v320, %v358
  %v375 = vadd.f32 %v321, %v359
  %v376 = vadd.f32 %v322, %v360
  %v377 = vadd.f32 %v323, %v361
  %v378 = vadd.f32 %v324, %v362
  %v379 = vadd.f32 %v325, %v363
  %v380 = vadd.f32 %v326, %v364
  %v381 = vadd.f32 %v327, %v365
  %v382 = vadd.f32 %v328, %v366
  %v383 = vld [vmem:[%s157 + $0x1] sm:$0xff]
  %v384 = vld [vmem:[%s157 + $0x11] sm:$0xff]
  %v385 = vld [vmem:[%s157 + $0x21] sm:$0xff]
  %v386 = vld [vmem:[%s157 + $0x31] sm:$0xff]
  %v387 = vld [vmem:[%s157 + $0x41] sm:$0xff]
  %v388 = vld [vmem:[%s157 + $0x51] sm:$0xff]
  %v389 = vld [vmem:[%s157 + $0x61] sm:$0xff]
  %v390 = vld [vmem:[%s157 + $0x71] sm:$0xff]
  %v391 = vld [vmem:[%s157 + $0xa1] sm:$0xff]
  %v392 = vld [vmem:[%s157 + $0xb1] sm:$0xff]
  %v393 = vld [vmem:[%s157 + $0xc1] sm:$0xff]
  %v394 = vld [vmem:[%s157 + $0xd1] sm:$0xff]
  %v395 = vld [vmem:[%s157 + $0xe1] sm:$0xff]
  %v396 = vld [vmem:[%s157 + $0xf1] sm:$0xff]
  %v397 = vld [vmem:[%s157 + $0x101] sm:$0xff]
  %v398 = vld [vmem:[%s157 + $0x111] sm:$0xff]
  %v400 = vlaneseq
  %v401 = vshrl.u32 %v400, 7
  %v402 = vsub.s32 0, %v401
  %v403 = vrot.slane %v178, %v402
  %v405 = vmul.f32 %v383, %v403
  %v406 = vmul.f32 %v384, %v403
  %v407 = vmul.f32 %v385, %v403
  %v408 = vmul.f32 %v386, %v403
  %v409 = vmul.f32 %v387, %v403
  %v410 = vmul.f32 %v388, %v403
  %v411 = vmul.f32 %v389, %v403
  %v412 = vmul.f32 %v390, %v403
  %v413 = vmul.f32 %v391, %v403
  %v414 = vmul.f32 %v392, %v403
  %v415 = vmul.f32 %v393, %v403
  %v416 = vmul.f32 %v394, %v403
  %v417 = vmul.f32 %v395, %v403
  %v418 = vmul.f32 %v396, %v403
  %v419 = vmul.f32 %v397, %v403
  %v420 = vmul.f32 %v398, %v403
  %v421 = vadd.f32 %v367, %v405
  %v422 = vadd.f32 %v368, %v406
  %v423 = vadd.f32 %v369, %v407
  %v424 = vadd.f32 %v370, %v408
  %v425 = vadd.f32 %v371, %v409
  %v426 = vadd.f32 %v372, %v410
  %v427 = vadd.f32 %v373, %v411
  %v428 = vadd.f32 %v374, %v412
  %v429 = vadd.f32 %v375, %v413
  %v430 = vadd.f32 %v376, %v414
  %v431 = vadd.f32 %v377, %v415
  %v432 = vadd.f32 %v378, %v416
  %v433 = vadd.f32 %v379, %v417
  %v434 = vadd.f32 %v380, %v418
  %v435 = vadd.f32 %v381, %v419
  %v436 = vadd.f32 %v382, %v420
  %v437 = vld [vmem:[%s157 + $0x2] sm:$0xff]
  %v438 = vld [vmem:[%s157 + $0x12] sm:$0xff]
  %v439 = vld [vmem:[%s157 + $0x22] sm:$0xff]
  %v440 = vld [vmem:[%s157 + $0x32] sm:$0xff]
  %v441 = vld [vmem:[%s157 + $0x42] sm:$0xff]
  %v442 = vld [vmem:[%s157 + $0x52] sm:$0xff]
  %v443 = vld [vmem:[%s157 + $0x62] sm:$0xff]
  %v444 = vld [vmem:[%s157 + $0x72] sm:$0xff]
  %v445 = vld [vmem:[%s157 + $0xa2] sm:$0xff]
  %v446 = vld [vmem:[%s157 + $0xb2] sm:$0xff]
  %v447 = vld [vmem:[%s157 + $0xc2] sm:$0xff]
  %v448 = vld [vmem:[%s157 + $0xd2] sm:$0xff]
  %v449 = vld [vmem:[%s157 + $0xe2] sm:$0xff]
  %v450 = vld [vmem:[%s157 + $0xf2] sm:$0xff]
  %v451 = vld [vmem:[%s157 + $0x102] sm:$0xff]
  %v452 = vld [vmem:[%s157 + $0x112] sm:$0xff]
  %v454 = vlaneseq
  %v455 = vshrl.u32 %v454, 7
  %v456 = vsub.s32 0, %v455
  %v457 = vrot.slane %v179, %v456
  %v459 = vmul.f32 %v437, %v457
  %v460 = vmul.f32 %v438, %v457
  %v461 = vmul.f32 %v439, %v457
  %v462 = vmul.f32 %v440, %v457
  %v463 = vmul.f32 %v441, %v457
  %v464 = vmul.f32 %v442, %v457
  %v465 = vmul.f32 %v443, %v457
  %v466 = vmul.f32 %v444, %v457
  %v467 = vmul.f32 %v445, %v457
  %v468 = vmul.f32 %v446, %v457
  %v469 = vmul.f32 %v447, %v457
  %v470 = vmul.f32 %v448, %v457
  %v471 = vmul.f32 %v449, %v457
  %v472 = vmul.f32 %v450, %v457
  %v473 = vmul.f32 %v451, %v457
  %v474 = vmul.f32 %v452, %v457
  %v475 = vadd.f32 %v421, %v459
  %v476 = vadd.f32 %v422, %v460
  %v477 = vadd.f32 %v423, %v461
  %v478 = vadd.f32 %v424, %v462
  %v479 = vadd.f32 %v425, %v463
  %v480 = vadd.f32 %v426, %v464
  %v481 = vadd.f32 %v427, %v465
  %v482 = vadd.f32 %v428, %v466
  %v483 = vadd.f32 %v429, %v467
  %v484 = vadd.f32 %v430, %v468
  %v485 = vadd.f32 %v431, %v469
  %v486 = vadd.f32 %v432, %v470
  %v487 = vadd.f32 %v433, %v471
  %v488 = vadd.f32 %v434, %v472
  %v489 = vadd.f32 %v435, %v473
  %v490 = vadd.f32 %v436, %v474
  %s491 = scalar_lea.vmem [#allocation2], 32
  %v492 = vld [vmem:[%s491] sm:$0xff]
  %v493 = vld [vmem:[%s491 + $0x10] sm:$0xff]
  %v494 = vld [vmem:[%s491 + $0x20] sm:$0xff]
  %v495 = vld [vmem:[%s491 + $0x30] sm:$0xff]
  %v496 = vld [vmem:[%s491 + $0x40] sm:$0xff]
  %v497 = vld [vmem:[%s491 + $0x50] sm:$0xff]
  %v498 = vld [vmem:[%s491 + $0x60] sm:$0xff]
  %v499 = vld [vmem:[%s491 + $0x70] sm:$0xff]
  %v500 = vld [vmem:[%s491 + $0xa0] sm:$0xff]
  %v501 = vld [vmem:[%s491 + $0xb0] sm:$0xff]
  %v502 = vld [vmem:[%s491 + $0xc0] sm:$0xff]
  %v503 = vld [vmem:[%s491 + $0xd0] sm:$0xff]
  %v504 = vld [vmem:[%s491 + $0xe0] sm:$0xff]
  %v505 = vld [vmem:[%s491 + $0xf0] sm:$0xff]
  %v506 = vld [vmem:[%s491 + $0x100] sm:$0xff]
  %v507 = vld [vmem:[%s491 + $0x110] sm:$0xff]
  %v509 = vlaneseq
  %v510 = vshrl.u32 %v509, 7
  %v511 = vsub.s32 0, %v510
  %v512 = vrot.slane %v180, %v511
  %v514 = vmul.f32 %v492, %v512
  %v515 = vmul.f32 %v493, %v512
  %v516 = vmul.f32 %v494, %v512
  %v517 = vmul.f32 %v495, %v512
  %v518 = vmul.f32 %v496, %v512
  %v519 = vmul.f32 %v497, %v512
  %v520 = vmul.f32 %v498, %v512
  %v521 = vmul.f32 %v499, %v512
  %v522 = vmul.f32 %v500, %v512
  %v523 = vmul.f32 %v501, %v512
  %v524 = vmul.f32 %v502, %v512
  %v525 = vmul.f32 %v503, %v512
  %v526 = vmul.f32 %v504, %v512
  %v527 = vmul.f32 %v505, %v512
  %v528 = vmul.f32 %v506, %v512
  %v529 = vmul.f32 %v507, %v512
  %v530 = vadd.f32 %v475, %v514
  %v531 = vadd.f32 %v476, %v515
  %v532 = vadd.f32 %v477, %v516
  %v533 = vadd.f32 %v478, %v517
  %v534 = vadd.f32 %v479, %v518
  %v535 = vadd.f32 %v480, %v519
  %v536 = vadd.f32 %v481, %v520
  %v537 = vadd.f32 %v482, %v521
  %v538 = vadd.f32 %v483, %v522
  %v539 = vadd.f32 %v484, %v523
  %v540 = vadd.f32 %v485, %v524
  %v541 = vadd.f32 %v486, %v525
  %v542 = vadd.f32 %v487, %v526
  %v543 = vadd.f32 %v488, %v527
  %v544 = vadd.f32 %v489, %v528
  %v545 = vadd.f32 %v490, %v529
  %v546 = vld [vmem:[%s491 + $0x1] sm:$0xff]
  %v547 = vld [vmem:[%s491 + $0x11] sm:$0xff]
  %v548 = vld [vmem:[%s491 + $0x21] sm:$0xff]
  %v549 = vld [vmem:[%s491 + $0x31] sm:$0xff]
  %v550 = vld [vmem:[%s491 + $0x41] sm:$0xff]
  %v551 = vld [vmem:[%s491 + $0x51] sm:$0xff]
  %v552 = vld [vmem:[%s491 + $0x61] sm:$0xff]
  %v553 = vld [vmem:[%s491 + $0x71] sm:$0xff]
  %v554 = vld [vmem:[%s491 + $0xa1] sm:$0xff]
  %v555 = vld [vmem:[%s491 + $0xb1] sm:$0xff]
  %v556 = vld [vmem:[%s491 + $0xc1] sm:$0xff]
  %v557 = vld [vmem:[%s491 + $0xd1] sm:$0xff]
  %v558 = vld [vmem:[%s491 + $0xe1] sm:$0xff]
  %v559 = vld [vmem:[%s491 + $0xf1] sm:$0xff]
  %v560 = vld [vmem:[%s491 + $0x101] sm:$0xff]
  %v561 = vld [vmem:[%s491 + $0x111] sm:$0xff]
  %v563 = vlaneseq
  %v564 = vshrl.u32 %v563, 7
  %v565 = vsub.s32 0, %v564
  %v566 = vrot.slane %v181, %v565
  %v568 = vmul.f32 %v546, %v566
  %v569 = vmul.f32 %v547, %v566
  %v570 = vmul.f32 %v548, %v566
  %v571 = vmul.f32 %v549, %v566
  %v572 = vmul.f32 %v550, %v566
  %v573 = vmul.f32 %v551, %v566
  %v574 = vmul.f32 %v552, %v566
  %v575 = vmul.f32 %v553, %v566
  %v576 = vmul.f32 %v554, %v566
  %v577 = vmul.f32 %v555, %v566
  %v578 = vmul.f32 %v556, %v566
  %v579 = vmul.f32 %v557, %v566
  %v580 = vmul.f32 %v558, %v566
  %v581 = vmul.f32 %v559, %v566
  %v582 = vmul.f32 %v560, %v566
  %v583 = vmul.f32 %v561, %v566
  %v584 = vadd.f32 %v530, %v568
  %v585 = vadd.f32 %v531, %v569
  %v586 = vadd.f32 %v532, %v570
  %v587 = vadd.f32 %v533, %v571
  %v588 = vadd.f32 %v534, %v572
  %v589 = vadd.f32 %v535, %v573
  %v590 = vadd.f32 %v536, %v574
  %v591 = vadd.f32 %v537, %v575
  %v592 = vadd.f32 %v538, %v576
  %v593 = vadd.f32 %v539, %v577
  %v594 = vadd.f32 %v540, %v578
  %v595 = vadd.f32 %v541, %v579
  %v596 = vadd.f32 %v542, %v580
  %v597 = vadd.f32 %v543, %v581
  %v598 = vadd.f32 %v544, %v582
  %v599 = vadd.f32 %v545, %v583
  %v600 = vld [vmem:[%s491 + $0x2] sm:$0xff]
  %v601 = vld [vmem:[%s491 + $0x12] sm:$0xff]
  %v602 = vld [vmem:[%s491 + $0x22] sm:$0xff]
  %v603 = vld [vmem:[%s491 + $0x32] sm:$0xff]
  %v604 = vld [vmem:[%s491 + $0x42] sm:$0xff]
  %v605 = vld [vmem:[%s491 + $0x52] sm:$0xff]
  %v606 = vld [vmem:[%s491 + $0x62] sm:$0xff]
  %v607 = vld [vmem:[%s491 + $0x72] sm:$0xff]
  %v608 = vld [vmem:[%s491 + $0xa2] sm:$0xff]
  %v609 = vld [vmem:[%s491 + $0xb2] sm:$0xff]
  %v610 = vld [vmem:[%s491 + $0xc2] sm:$0xff]
  %v611 = vld [vmem:[%s491 + $0xd2] sm:$0xff]
  %v612 = vld [vmem:[%s491 + $0xe2] sm:$0xff]
  %v613 = vld [vmem:[%s491 + $0xf2] sm:$0xff]
  %v614 = vld [vmem:[%s491 + $0x102] sm:$0xff]
  %v615 = vld [vmem:[%s491 + $0x112] sm:$0xff]
  %v617 = vlaneseq
  %v618 = vshrl.u32 %v617, 7
  %v619 = vsub.s32 0, %v618
  %v620 = vrot.slane %v182, %v619
  %v622 = vmul.f32 %v600, %v620
  %v623 = vmul.f32 %v601, %v620
  %v624 = vmul.f32 %v602, %v620
  %v625 = vmul.f32 %v603, %v620
  %v626 = vmul.f32 %v604, %v620
  %v627 = vmul.f32 %v605, %v620
  %v628 = vmul.f32 %v606, %v620
  %v629 = vmul.f32 %v607, %v620
  %v630 = vmul.f32 %v608, %v620
  %v631 = vmul.f32 %v609, %v620
  %v632 = vmul.f32 %v610, %v620
  %v633 = vmul.f32 %v611, %v620
  %v634 = vmul.f32 %v612, %v620
  %v635 = vmul.f32 %v613, %v620
  %v636 = vmul.f32 %v614, %v620
  %v637 = vmul.f32 %v615, %v620
  %v638 = vadd.f32 %v584, %v622
  %v639 = vadd.f32 %v585, %v623
  %v640 = vadd.f32 %v586, %v624
  %v641 = vadd.f32 %v587, %v625
  %v642 = vadd.f32 %v588, %v626
  %v643 = vadd.f32 %v589, %v627
  %v644 = vadd.f32 %v590, %v628
  %v645 = vadd.f32 %v591, %v629
  %v646 = vadd.f32 %v592, %v630
  %v647 = vadd.f32 %v593, %v631
  %v648 = vadd.f32 %v594, %v632
  %v649 = vadd.f32 %v595, %v633
  %v650 = vadd.f32 %v596, %v634
  %v651 = vadd.f32 %v597, %v635
  %v652 = vadd.f32 %v598, %v636
  %v653 = vadd.f32 %v599, %v637
  %v654 = vpack.c.bf16 %v639, %v638
  %v655 = vpack.c.bf16 %v641, %v640
  %v656 = vpack.c.bf16 %v643, %v642
  %v657 = vpack.c.bf16 %v645, %v644
  %v658 = vpack.c.bf16 %v647, %v646
  %v659 = vpack.c.bf16 %v649, %v648
  %v660 = vpack.c.bf16 %v651, %v650
  %v661 = vpack.c.bf16 %v653, %v652
  %v662 = vld [vmem:[%s4] sm:$0xf]
  %v663 = vld [vmem:[%s4 + $0x4] sm:$0xf]
  %v664 = vld [vmem:[%s4 + $0x8] sm:$0xf]
  %v665 = vld [vmem:[%s4 + $0xc] sm:$0xf]
  %v666 = vld [vmem:[%s4 + $0x10] sm:$0xf]
  %v667 = vld [vmem:[%s4 + $0x14] sm:$0xf]
  %v668 = vld [vmem:[%s4 + $0x18] sm:$0xf]
  %v669 = vld [vmem:[%s4 + $0x1c] sm:$0xf]
  %v670 = vld [vmem:[%s4 + $0x20] sm:$0xf]
  %v671 = vld [vmem:[%s4 + $0x24] sm:$0xf]
  %v672 = vld [vmem:[%s4 + $0x28] sm:$0xf]
  %v673 = vld [vmem:[%s4 + $0x2c] sm:$0xf]
  %v674 = vld [vmem:[%s4 + $0x30] sm:$0xf]
  %v675 = vld [vmem:[%s4 + $0x34] sm:$0xf]
  %v676 = vld [vmem:[%s4 + $0x38] sm:$0xf]
  %v677 = vld [vmem:[%s4 + $0x3c] sm:$0xf]
  %v694 = vunpack.c.l.b16 %v662
  %v695 = vunpack.c.l.b16 %v663
  %v696 = vunpack.c.l.b16 %v664
  %v697 = vunpack.c.l.b16 %v665
  %v698 = vunpack.c.l.b16 %v666
  %v699 = vunpack.c.l.b16 %v667
  %v700 = vunpack.c.l.b16 %v668
  %v701 = vunpack.c.l.b16 %v669
  %v702 = vunpack.c.l.b16 %v670
  %v703 = vunpack.c.l.b16 %v671
  %v704 = vunpack.c.l.b16 %v672
  %v705 = vunpack.c.l.b16 %v673
  %v706 = vunpack.c.l.b16 %v674
  %v707 = vunpack.c.l.b16 %v675
  %v708 = vunpack.c.l.b16 %v676
  %v709 = vunpack.c.l.b16 %v677
  %v710 = vpack.c.b16 %v695, %v694
  %v711 = vpack.c.b16 %v697, %v696
  %v712 = vpack.c.b16 %v699, %v698
  %v713 = vpack.c.b16 %v701, %v700
  %v714 = vpack.c.b16 %v703, %v702
  %v715 = vpack.c.b16 %v705, %v704
  %v716 = vpack.c.b16 %v707, %v706
  %v717 = vpack.c.b16 %v709, %v708
  %726 = vmatprep.subr.bf16.mxu0 0
  %727 = vmatpush1.bf16.msra.mxu0 %v710
  %728 = vmatprep.subr.bf16.mxu0 0
  %729 = vmatpush1.bf16.msra.mxu0 %v711
  %730 = vmatprep.subr.bf16.mxu0 0
  %731 = vmatpush1.bf16.msra.mxu0 %v712
  %732 = vmatprep.subr.bf16.mxu0 0
  %733 = vmatpush1.bf16.msra.mxu0 %v713
  %734 = vmatprep.subr.bf16.mxu0 0
  %735 = vmatpush1.bf16.msra.mxu0 %v714
  %736 = vmatprep.subr.bf16.mxu0 0
  %737 = vmatpush1.bf16.msra.mxu0 %v715
  %738 = vmatprep.subr.bf16.mxu0 0
  %739 = vmatpush1.bf16.msra.mxu0 %v716
  %740 = vmatprep.subr.bf16.mxu0 0
  %741 = vmatpush1.bf16.msra.mxu0 %v717
  %742 = vmatprep.subr.bf16.mxu0 0
  %743 = vmatpush1.bf16.msra.mxu0 0
  %744 = vmatprep.subr.bf16.mxu0 0
  %745 = vmatpush1.bf16.msra.mxu0 0
  %746 = vmatprep.subr.bf16.mxu0 0
  %747 = vmatpush1.bf16.msra.mxu0 0
  %748 = vmatprep.subr.bf16.mxu0 0
  %749 = vmatpush1.bf16.msra.mxu0 0
  %750 = vmatprep.subr.bf16.mxu0 0
  %751 = vmatpush1.bf16.msra.mxu0 0
  %752 = vmatprep.subr.bf16.mxu0 0
  %753 = vmatpush1.bf16.msra.mxu0 0
  %754 = vmatprep.subr.bf16.mxu0 0
  %755 = vmatpush1.bf16.msra.mxu0 0
  %756 = vmatprep.subr.bf16.mxu0 0
  %757 = vmatpush1.bf16.msra.mxu0 0
  %758 = vmatprep.mubr.bf16.mxu0 0
  %759 = vmatmul.mubr.bf16.gmra.mrb[0].mxu0 %v654
  %v760 = vpop.f32.mrb[0].mxu0
  %v761 = vadd.f32 0.0, %v760
  %v762 = vpop.f32.mrb[0].mxu0
  %v763 = vpop.f32.mrb[0].mxu0
  %v764 = vadd.f32 0.0, %v763
  %v765 = vpop.f32.mrb[0].mxu0
  %766 = vmatprep.mubr.bf16.mxu0 0
  %767 = vmatmul.mubr.bf16.gmra.mrb[0].mxu0 %v655
  %v768 = vpop.f32.mrb[0].mxu0
  %v769 = vadd.f32 0.0, %v768
  %v770 = vpop.f32.mrb[0].mxu0
  %v771 = vpop.f32.mrb[0].mxu0
  %v772 = vadd.f32 0.0, %v771
  %v773 = vpop.f32.mrb[0].mxu0
  %774 = vmatprep.mubr.bf16.mxu0 0
  %775 = vmatmul.mubr.bf16.gmra.mrb[0].mxu0 %v656
  %v776 = vpop.f32.mrb[0].mxu0
  %v777 = vadd.f32 0.0, %v776
  %v778 = vpop.f32.mrb[0].mxu0
  %v779 = vpop.f32.mrb[0].mxu0
  %v780 = vadd.f32 0.0, %v779
  %v781 = vpop.f32.mrb[0].mxu0
  %782 = vmatprep.mubr.bf16.mxu0 0
  %783 = vmatmul.mubr.bf16.gmra.mrb[0].mxu0 %v657
  %v784 = vpop.f32.mrb[0].mxu0
  %v785 = vadd.f32 0.0, %v784
  %v786 = vpop.f32.mrb[0].mxu0
  %v787 = vpop.f32.mrb[0].mxu0
  %v788 = vadd.f32 0.0, %v787
  %v789 = vpop.f32.mrb[0].mxu0
  %790 = vmatprep.mubr.bf16.mxu0 0
  %791 = vmatmul.mubr.bf16.gmra.mrb[0].mxu0 %v658
  %v792 = vpop.f32.mrb[0].mxu0
  %v793 = vadd.f32 0.0, %v792
  %v794 = vpop.f32.mrb[0].mxu0
  %v795 = vpop.f32.mrb[0].mxu0
  %v796 = vadd.f32 0.0, %v795
  %v797 = vpop.f32.mrb[0].mxu0
  %798 = vmatprep.mubr.bf16.mxu0 0
  %799 = vmatmul.mubr.bf16.gmra.mrb[0].mxu0 %v659
  %v800 = vpop.f32.mrb[0].mxu0
  %v801 = vadd.f32 0.0, %v800
  %v802 = vpop.f32.mrb[0].mxu0
  %v803 = vpop.f32.mrb[0].mxu0
  %v804 = vadd.f32 0.0, %v803
  %v805 = vpop.f32.mrb[0].mxu0
  %806 = vmatprep.mubr.bf16.mxu0 0
  %807 = vmatmul.mubr.bf16.gmra.mrb[0].mxu0 %v660
  %v808 = vpop.f32.mrb[0].mxu0
  %v809 = vadd.f32 0.0, %v808
  %v810 = vpop.f32.mrb[0].mxu0
  %v811 = vpop.f32.mrb[0].mxu0
  %v812 = vadd.f32 0.0, %v811
  %v813 = vpop.f32.mrb[0].mxu0
  %814 = vmatprep.mubr.bf16.mxu0 0
  %815 = vmatmul.mubr.bf16.gmra.mrb[0].mxu0 %v661
  %v816 = vpop.f32.mrb[0].mxu0
  %v817 = vadd.f32 0.0, %v816
  %v818 = vpop.f32.mrb[0].mxu0
  %v819 = vpop.f32.mrb[0].mxu0
  %v820 = vadd.f32 0.0, %v819
  %v821 = vpop.f32.mrb[0].mxu0
  %822 = vdwg.mxu0
  %v823 = vpack.c.bf16 %v761, %v761
  %v824 = vpack.c.bf16 %v764, %v764
  %v825 = vpack.c.bf16 %v769, %v769
  %v826 = vpack.c.bf16 %v772, %v772
  %v827 = vpack.c.bf16 %v777, %v777
  %v828 = vpack.c.bf16 %v780, %v780
  %v829 = vpack.c.bf16 %v785, %v785
  %v830 = vpack.c.bf16 %v788, %v788
  %v831 = vpack.c.bf16 %v793, %v793
  %v832 = vpack.c.bf16 %v796, %v796
  %v833 = vpack.c.bf16 %v801, %v801
  %v834 = vpack.c.bf16 %v804, %v804
  %v835 = vpack.c.bf16 %v809, %v809
  %v836 = vpack.c.bf16 %v812, %v812
  %v837 = vpack.c.bf16 %v817, %v817
  %v838 = vpack.c.bf16 %v820, %v820
  %839 = vst [vmem:[%s5] sm:$0xf] %v823
  %840 = vst [vmem:[%s5 + $0x4] sm:$0xf] %v824
  %841 = vst [vmem:[%s5 + $0x8] sm:$0xf] %v825
  %842 = vst [vmem:[%s5 + $0xc] sm:$0xf] %v826
  %843 = vst [vmem:[%s5 + $0x10] sm:$0xf] %v827
  %844 = vst [vmem:[%s5 + $0x14] sm:$0xf] %v828
  %845 = vst [vmem:[%s5 + $0x18] sm:$0xf] %v829
  %846 = vst [vmem:[%s5 + $0x1c] sm:$0xf] %v830
  %847 = vst [vmem:[%s5 + $0x20] sm:$0xf] %v831
  %848 = vst [vmem:[%s5 + $0x24] sm:$0xf] %v832
  %849 = vst [vmem:[%s5 + $0x28] sm:$0xf] %v833
  %850 = vst [vmem:[%s5 + $0x2c] sm:$0xf] %v834
  %851 = vst [vmem:[%s5 + $0x30] sm:$0xf] %v835
  %852 = vst [vmem:[%s5 + $0x34] sm:$0xf] %v836
  %853 = vst [vmem:[%s5 + $0x38] sm:$0xf] %v837
  %854 = vst [vmem:[%s5 + $0x3c] sm:$0xf] %v838
  %v855 = vadd.f32 %v761, %v764
  %v856 = vadd.f32 %v855, %v769
  %v857 = vadd.f32 %v856, %v772
  %v858 = vadd.f32 %v857, %v777
  %v859 = vadd.f32 %v858, %v780
  %v860 = vadd.f32 %v859, %v785
  %v861 = vadd.f32 %v860, %v788
  %v862 = vadd.f32 %v861, %v793
  %v863 = vadd.f32 %v862, %v796
  %v864 = vadd.f32 %v863, %v801
  %v865 = vadd.f32 %v864, %v804
  %v866 = vadd.f32 %v865, %v809
  %v867 = vadd.f32 %v866, %v812
  %v868 = vadd.f32 %v867, %v817
  %v869 = vadd.f32 %v868, %v820
  %v870 = vrot.slane %v869, 4
  %v871 = vadd.f32 %v869, %v870
  %v872 = vrot.slane %v871, 2
  %v873 = vadd.f32 %v871, %v872
  %v874 = vrot.slane %v873, 1
  %v875 = vadd.f32 %v873, %v874
  %v876 = vmul.f32 %v761, %v761
  %v877 = vmul.f32 %v764, %v764
  %v878 = vmul.f32 %v769, %v769
  %v879 = vmul.f32 %v772, %v772
  %v880 = vmul.f32 %v777, %v777
  %v881 = vmul.f32 %v780, %v780
  %v882 = vmul.f32 %v785, %v785
  %v883 = vmul.f32 %v788, %v788
  %v884 = vmul.f32 %v793, %v793
  %v885 = vmul.f32 %v796, %v796
  %v886 = vmul.f32 %v801, %v801
  %v887 = vmul.f32 %v804, %v804
  %v888 = vmul.f32 %v809, %v809
  %v889 = vmul.f32 %v812, %v812
  %v890 = vmul.f32 %v817, %v817
  %v891 = vmul.f32 %v820, %v820
  %v892 = vadd.f32 %v876, %v877
  %v893 = vadd.f32 %v892, %v878
  %v894 = vadd.f32 %v893, %v879
  %v895 = vadd.f32 %v894, %v880
  %v896 = vadd.f32 %v895, %v881
  %v897 = vadd.f32 %v896, %v882
  %v898 = vadd.f32 %v897, %v883
  %v899 = vadd.f32 %v898, %v884
  %v900 = vadd.f32 %v899, %v885
  %v901 = vadd.f32 %v900, %v886
  %v902 = vadd.f32 %v901, %v887
  %v903 = vadd.f32 %v902, %v888
  %v904 = vadd.f32 %v903, %v889
  %v905 = vadd.f32 %v904, %v890
  %v906 = vadd.f32 %v905, %v891
  %v907 = vrot.slane %v906, 4
  %v908 = vadd.f32 %v906, %v907
  %v909 = vrot.slane %v908, 2
  %v910 = vadd.f32 %v908, %v909
  %v911 = vrot.slane %v910, 1
  %v912 = vadd.f32 %v910, %v911
  %vm913 = vcmask 1040384
  %v914 = vsel %vm913, %v875, %v912
  %915 = vst [vmem:[%s6] sm:$0x3] %v914
  // Predicated region
  $region22: #{sep_conv_forward.4} parent=0 // pred_check
    _
  $region23: #{sep_conv_forward.4} parent=0 // pred_check_branch
    %917 = sbr.rel (0) target = $region25
  $region24: #{sep_conv_forward.4} parent=0 // pred_region
    _
  $region25: #{sep_conv_forward.4} parent=0 // pred_fallthru
    _
  // Predicated region
  $region26: #{sep_conv_forward.4} parent=0 // pred_check
    _
  $region27: #{sep_conv_forward.4} parent=0 // pred_check_branch
    %919 = sbr.rel (0) target = $region29
  $region28: #{sep_conv_forward.4} parent=0 // pred_region
    _
  $region29: #{sep_conv_forward.4} parent=0 // pred_fallthru
    _
  // Predicated region
  $region30: #{sep_conv_forward.4} parent=0 // pred_check
    _
  $region31: #{sep_conv_forward.4} parent=0 // pred_check_branch
    %921 = sbr.rel (0) target = $region33
  $region32: #{sep_conv_forward.4} parent=0 // pred_region
    _
  $region33: #{sep_conv_forward.4} parent=0 // pred_fallthru
    _
  // Predicated region
  $region34: #{sep_conv_forward.4} parent=0 // pred_check
    _
  $region35: #{sep_conv_forward.4} parent=0 // pred_check_branch
    %923 = sbr.rel (0) target = $region37
  $region36: #{sep_conv_forward.4} parent=0 // pred_region
    _
  $region37: #{sep_conv_forward.4} parent=0 // pred_fallthru
    _

// kernel: sep_conv_forward.3
$region0: #{sep_conv_forward.3}
  #allocation0 [shape = 'u32[]', space=smem, size = 0x4, offset = 0x4, fixed_abs, tag = 'smem constant byte address 0x4 - core index']
  #allocation1 [shape = 'u32[144,128]{1,0:T(1,128)}', space=vmem, size = 0x12000, scoped, tag = 'internal scratch']
  %s0 = inlined_call_operand.vmem [shape: f32[2,9,9,512], index: 0, kind: input, shape index: {}]
  %s1 = inlined_call_operand.vmem [shape: f32[9,1,128], index: 1, kind: input, shape index: {}]
  %s2 = inlined_call_operand.vmem [shape: bf16[128,128], index: 2, kind: input, shape index: {}]
  %s3 = inlined_call_operand.vmem [shape: bf16[2,8,8,128], index: 3, kind: output, shape index: {0}]
  %s4 = inlined_call_operand.vmem [shape: f32[1,2,128], index: 4, kind: output, shape index: {1}]
  %5 = xla_tuple %s3, %s4
  %s6 = sld [smem:[#allocation0]]
  $region30: #{sep_conv_forward.3} parent=0
    _
  %s8 = ssub.s32 1, %s6
  %s9 = scalar_select 0, %s8, %s6
  // Predicated region
  $region2: #{sep_conv_forward.3} parent=0 // pred_check
    _
  $region3: #{sep_conv_forward.3} parent=0 // pred_check_branch
    %11 = sbr.rel (0) target = $region5
  $region4: #{sep_conv_forward.3} parent=0 // pred_region
    _
  $region5: #{sep_conv_forward.3} parent=0 // pred_fallthru
    _
  // Predicated region
  $region6: #{sep_conv_forward.3} parent=0 // pred_check
    _
  $region7: #{sep_conv_forward.3} parent=0 // pred_check_branch
    %13 = sbr.rel (0) target = $region9
  $region8: #{sep_conv_forward.3} parent=0 // pred_region
    _
  $region9: #{sep_conv_forward.3} parent=0 // pred_fallthru
    _
  // Predicated region
  $region10: #{sep_conv_forward.3} parent=0 // pred_check
    _
  $region11: #{sep_conv_forward.3} parent=0 // pred_check_branch
    %15 = sbr.rel (0) target = $region13
  $region12: #{sep_conv_forward.3} parent=0 // pred_region
    _
  $region13: #{sep_conv_forward.3} parent=0 // pred_fallthru
    _
  %v17 = vld [vmem:[%s1] sm:$0x1]
  %v18 = vld [vmem:[%s1 + $0x1] sm:$0x1]
  %v19 = vld [vmem:[%s1 + $0x2] sm:$0x1]
  %v20 = vld [vmem:[%s1 + $0x3] sm:$0x1]
  %v21 = vld [vmem:[%s1 + $0x4] sm:$0x1]
  %v22 = vld [vmem:[%s1 + $0x5] sm:$0x1]
  %v23 = vld [vmem:[%s1 + $0x6] sm:$0x1]
  %v24 = vld [vmem:[%s1 + $0x7] sm:$0x1]
  %v25 = vld [vmem:[%s1 + $0x8] sm:$0x1]
  %v26 = vld [vmem:[%s0] sm:$0xff]
  %v27 = vld [vmem:[%s0 + $0x40] sm:$0xff]
  %v28 = vld [vmem:[%s0 + $0x80] sm:$0xff]
  %v29 = vld [vmem:[%s0 + $0xc0] sm:$0xff]
  %v30 = vld [vmem:[%s0 + $0x100] sm:$0xff]
  %v31 = vld [vmem:[%s0 + $0x140] sm:$0xff]
  %v32 = vld [vmem:[%s0 + $0x180] sm:$0xff]
  %v33 = vld [vmem:[%s0 + $0x1c0] sm:$0xff]
  %v34 = vld [vmem:[%s0 + $0x240] sm:$0xff]
  %v35 = vld [vmem:[%s0 + $0x280] sm:$0xff]
  %v36 = vld [vmem:[%s0 + $0x2c0] sm:$0xff]
  %v37 = vld [vmem:[%s0 + $0x300] sm:$0xff]
  %v38 = vld [vmem:[%s0 + $0x340] sm:$0xff]
  %v39 = vld [vmem:[%s0 + $0x380] sm:$0xff]
  %v40 = vld [vmem:[%s0 + $0x3c0] sm:$0xff]
  %v41 = vld [vmem:[%s0 + $0x400] sm:$0xff]
  %v43 = vlaneseq
  %v44 = vshrl.u32 %v43, 7
  %v45 = vsub.s32 0, %v44
  %v46 = vrot.slane %v17, %v45
  %v48 = vmul.f32 %v26, %v46
  %v49 = vmul.f32 %v27, %v46
  %v50 = vmul.f32 %v28, %v46
  %v51 = vmul.f32 %v29, %v46
  %v52 = vmul.f32 %v30, %v46
  %v53 = vmul.f32 %v31, %v46
  %v54 = vmul.f32 %v32, %v46
  %v55 = vmul.f32 %v33, %v46
  %v56 = vmul.f32 %v34, %v46
  %v57 = vmul.f32 %v35, %v46
  %v58 = vmul.f32 %v36, %v46
  %v59 = vmul.f32 %v37, %v46
  %v60 = vmul.f32 %v38, %v46
  %v61 = vmul.f32 %v39, %v46
  %v62 = vmul.f32 %v40, %v46
  %v63 = vmul.f32 %v41, %v46
  %v64 = vld [vmem:[%s0 + $0x8] sm:$0xff]
  %v65 = vld [vmem:[%s0 + $0x48] sm:$0xff]
  %v66 = vld [vmem:[%s0 + $0x88] sm:$0xff]
  %v67 = vld [vmem:[%s0 + $0xc8] sm:$0xff]
  %v68 = vld [vmem:[%s0 + $0x108] sm:$0xff]
  %v69 = vld [vmem:[%s0 + $0x148] sm:$0xff]
  %v70 = vld [vmem:[%s0 + $0x188] sm:$0xff]
  %v71 = vld [vmem:[%s0 + $0x1c8] sm:$0xff]
  %v72 = vld [vmem:[%s0 + $0x248] sm:$0xff]
  %v73 = vld [vmem:[%s0 + $0x288] sm:$0xff]
  %v74 = vld [vmem:[%s0 + $0x2c8] sm:$0xff]
  %v75 = vld [vmem:[%s0 + $0x308] sm:$0xff]
  %v76 = vld [vmem:[%s0 + $0x348] sm:$0xff]
  %v77 = vld [vmem:[%s0 + $0x388] sm:$0xff]
  %v78 = vld [vmem:[%s0 + $0x3c8] sm:$0xff]
  %v79 = vld [vmem:[%s0 + $0x408] sm:$0xff]
  %v81 = vlaneseq
  %v82 = vshrl.u32 %v81, 7
  %v83 = vsub.s32 0, %v82
  %v84 = vrot.slane %v18, %v83
  %v86 = vmul.f32 %v64, %v84
  %v87 = vmul.f32 %v65, %v84
  %v88 = vmul.f32 %v66, %v84
  %v89 = vmul.f32 %v67, %v84
  %v90 = vmul.f32 %v68, %v84
  %v91 = vmul.f32 %v69, %v84
  %v92 = vmul.f32 %v70, %v84
  %v93 = vmul.f32 %v71, %v84
  %v94 = vmul.f32 %v72, %v84
  %v95 = vmul.f32 %v73, %v84
  %v96 = vmul.f32 %v74, %v84
  %v97 = vmul.f32 %v75, %v84
  %v98 = vmul.f32 %v76, %v84
  %v99 = vmul.f32 %v77, %v84
  %v100 = vmul.f32 %v78, %v84
  %v101 = vmul.f32 %v79, %v84
  %v102 = vadd.f32 %v48, %v86
  %v103 = vadd.f32 %v49, %v87
  %v104 = vadd.f32 %v50, %v88
  %v105 = vadd.f32 %v51, %v89
  %v106 = vadd.f32 %v52, %v90
  %v107 = vadd.f32 %v53, %v91
  %v108 = vadd.f32 %v54, %v92
  %v109 = vadd.f32 %v55, %v93
  %v110 = vadd.f32 %v56, %v94
  %v111 = vadd.f32 %v57, %v95
  %v112 = vadd.f32 %v58, %v96
  %v113 = vadd.f32 %v59, %v97
  %v114 = vadd.f32 %v60, %v98
  %v115 = vadd.f32 %v61, %v99
  %v116 = vadd.f32 %v62, %v100
  %v117 = vadd.f32 %v63, %v101
  %v118 = vld [vmem:[%s0] sm:$0xfe]
  %v119 = vld [vmem:[%s0 + $0x20] sm:$0x1]
  %v120 = vld [vmem:[%s0 + $0x40] sm:$0xfe]
  %v121 = vld [vmem:[%s0 + $0x60] sm:$0x1]
  %v122 = vld [vmem:[%s0 + $0x80] sm:$0xfe]
  %v123 = vld [vmem:[%s0 + $0xa0] sm:$0x1]
  %v124 = vld [vmem:[%s0 + $0xc0] sm:$0xfe]
  %v125 = vld [vmem:[%s0 + $0xe0] sm:$0x1]
  %v126 = vld [vmem:[%s0 + $0x100] sm:$0xfe]
  %v127 = vld [vmem:[%s0 + $0x120] sm:$0x1]
  %v128 = vld [vmem:[%s0 + $0x140] sm:$0xfe]
  %v129 = vld [vmem:[%s0 + $0x160] sm:$0x1]
  %v130 = vld [vmem:[%s0 + $0x180] sm:$0xfe]
  %v131 = vld [vmem:[%s0 + $0x1a0] sm:$0x1]
  %v132 = vld [vmem:[%s0 + $0x1c0] sm:$0xfe]
  %v133 = vld [vmem:[%s0 + $0x1e0] sm:$0x1]
  %v134 = vld [vmem:[%s0 + $0x240] sm:$0xfe]
  %v135 = vld [vmem:[%s0 + $0x260] sm:$0x1]
  %v136 = vld [vmem:[%s0 + $0x280] sm:$0xfe]
  %v137 = vld [vmem:[%s0 + $0x2a0] sm:$0x1]
  %v138 = vld [vmem:[%s0 + $0x2c0] sm:$0xfe]
  %v139 = vld [vmem:[%s0 + $0x2e0] sm:$0x1]
  %v140 = vld [vmem:[%s0 + $0x300] sm:$0xfe]
  %v141 = vld [vmem:[%s0 + $0x320] sm:$0x1]
  %v142 = vld [vmem:[%s0 + $0x340] sm:$0xfe]
  %v143 = vld [vmem:[%s0 + $0x360] sm:$0x1]
  %v144 = vld [vmem:[%s0 + $0x380] sm:$0xfe]
  %v145 = vld [vmem:[%s0 + $0x3a0] sm:$0x1]
  %v146 = vld [vmem:[%s0 + $0x3c0] sm:$0xfe]
  %v147 = vld [vmem:[%s0 + $0x3e0] sm:$0x1]
  %v148 = vld [vmem:[%s0 + $0x400] sm:$0xfe]
  %v149 = vld [vmem:[%s0 + $0x420] sm:$0x1]
  %v151 = vlaneseq
  %v152 = vshrl.u32 %v151, 7
  %v153 = vsub.s32 0, %v152
  %v154 = vrot.slane %v19, %v153
  %v156 = vmul.f32 %v118, %v154
  %v157 = vmul.f32 %v119, %v154
  %v158 = vmul.f32 %v120, %v154
  %v159 = vmul.f32 %v121, %v154
  %v160 = vmul.f32 %v122, %v154
  %v161 = vmul.f32 %v123, %v154
  %v162 = vmul.f32 %v124, %v154
  %v163 = vmul.f32 %v125, %v154
  %v164 = vmul.f32 %v126, %v154
  %v165 = vmul.f32 %v127, %v154
  %v166 = vmul.f32 %v128, %v154
  %v167 = vmul.f32 %v129, %v154
  %v168 = vmul.f32 %v130, %v154
  %v169 = vmul.f32 %v131, %v154
  %v170 = vmul.f32 %v132, %v154
  %v171 = vmul.f32 %v133, %v154
  %v172 = vmul.f32 %v134, %v154
  %v173 = vmul.f32 %v135, %v154
  %v174 = vmul.f32 %v136, %v154
  %v175 = vmul.f32 %v137, %v154
  %v176 = vmul.f32 %v138, %v154
  %v177 = vmul.f32 %v139, %v154
  %v178 = vmul.f32 %v140, %v154
  %v179 = vmul.f32 %v141, %v154
  %v180 = vmul.f32 %v142, %v154
  %v181 = vmul.f32 %v143, %v154
  %v182 = vmul.f32 %v144, %v154
  %v183 = vmul.f32 %v145, %v154
  %v184 = vmul.f32 %v146, %v154
  %v185 = vmul.f32 %v147, %v154
  %v186 = vmul.f32 %v148, %v154
  %v187 = vmul.f32 %v149, %v154
  %vm220 = vcmask 1046528
  %v221 = vrot.slane %v156, 1
  %v222 = vrot.slane %v157, 1
  %v223 = vsel %vm220, %v221, %v222
  %v224 = vrot.slane %v158, 1
  %v225 = vrot.slane %v159, 1
  %v226 = vsel %vm220, %v224, %v225
  %v227 = vrot.slane %v160, 1
  %v228 = vrot.slane %v161, 1
  %v229 = vsel %vm220, %v227, %v228
  %v230 = vrot.slane %v162, 1
  %v231 = vrot.slane %v163, 1
  %v232 = vsel %vm220, %v230, %v231
  %v233 = vrot.slane %v164, 1
  %v234 = vrot.slane %v165, 1
  %v235 = vsel %vm220, %v233, %v234
  %v236 = vrot.slane %v166, 1
  %v237 = vrot.slane %v167, 1
  %v238 = vsel %vm220, %v236, %v237
  %v239 = vrot.slane %v168, 1
  %v240 = vrot.slane %v169, 1
  %v241 = vsel %vm220, %v239, %v240
  %v242 = vrot.slane %v170, 1
  %v243 = vrot.slane %v171, 1
  %v244 = vsel %vm220, %v242, %v243
  %v245 = vrot.slane %v172, 1
  %v246 = vrot.slane %v173, 1
  %v247 = vsel %vm220, %v245, %v246
  %v248 = vrot.slane %v174, 1
  %v249 = vrot.slane %v175, 1
  %v250 = vsel %vm220, %v248, %v249
  %v251 = vrot.slane %v176, 1
  %v252 = vrot.slane %v177, 1
  %v253 = vsel %vm220, %v251, %v252
  %v254 = vrot.slane %v178, 1
  %v255 = vrot.slane %v179, 1
  %v256 = vsel %vm220, %v254, %v255
  %v257 = vrot.slane %v180, 1
  %v258 = vrot.slane %v181, 1
  %v259 = vsel %vm220, %v257, %v258
  %v260 = vrot.slane %v182, 1
  %v261 = vrot.slane %v183, 1
  %v262 = vsel %vm220, %v260, %v261
  %v263 = vrot.slane %v184, 1
  %v264 = vrot.slane %v185, 1
  %v265 = vsel %vm220, %v263, %v264
  %v266 = vrot.slane %v186, 1
  %v267 = vrot.slane %v187, 1
  %v268 = vsel %vm220, %v266, %v267
  %v285 = vadd.f32 %v102, %v223
  %v286 = vadd.f32 %v103, %v226
  %v287 = vadd.f32 %v104, %v229
  %v288 = vadd.f32 %v105, %v232
  %v289 = vadd.f32 %v106, %v235
  %v290 = vadd.f32 %v107, %v238
  %v291 = vadd.f32 %v108, %v241
  %v292 = vadd.f32 %v109, %v244
  %v293 = vadd.f32 %v110, %v247
  %v294 = vadd.f32 %v111, %v250
  %v295 = vadd.f32 %v112, %v253
  %v296 = vadd.f32 %v113, %v256
  %v297 = vadd.f32 %v114, %v259
  %v298 = vadd.f32 %v115, %v262
  %v299 = vadd.f32 %v116, %v265
  %v300 = vadd.f32 %v117, %v268
  %v301 = vld [vmem:[%s0 + $0x10] sm:$0xff]
  %v302 = vld [vmem:[%s0 + $0x50] sm:$0xff]
  %v303 = vld [vmem:[%s0 + $0x90] sm:$0xff]
  %v304 = vld [vmem:[%s0 + $0xd0] sm:$0xff]
  %v305 = vld [vmem:[%s0 + $0x110] sm:$0xff]
  %v306 = vld [vmem:[%s0 + $0x150] sm:$0xff]
  %v307 = vld [vmem:[%s0 + $0x190] sm:$0xff]
  %v308 = vld [vmem:[%s0 + $0x1d0] sm:$0xff]
  %v309 = vld [vmem:[%s0 + $0x250] sm:$0xff]
  %v310 = vld [vmem:[%s0 + $0x290] sm:$0xff]
  %v311 = vld [vmem:[%s0 + $0x2d0] sm:$0xff]
  %v312 = vld [vmem:[%s0 + $0x310] sm:$0xff]
  %v313 = vld [vmem:[%s0 + $0x350] sm:$0xff]
  %v314 = vld [vmem:[%s0 + $0x390] sm:$0xff]
  %v315 = vld [vmem:[%s0 + $0x3d0] sm:$0xff]
  %v316 = vld [vmem:[%s0 + $0x410] sm:$0xff]
  %v318 = vlaneseq
  %v319 = vshrl.u32 %v318, 7
  %v320 = vsub.s32 0, %v319
  %v321 = vrot.slane %v20, %v320
  %v323 = vmul.f32 %v301, %v321
  %v324 = vmul.f32 %v302, %v321
  %v325 = vmul.f32 %v303, %v321
  %v326 = vmul.f32 %v304, %v321
  %v327 = vmul.f32 %v305, %v321
  %v328 = vmul.f32 %v306, %v321
  %v329 = vmul.f32 %v307, %v321
  %v330 = vmul.f32 %v308, %v321
  %v331 = vmul.f32 %v309, %v321
  %v332 = vmul.f32 %v310, %v321
  %v333 = vmul.f32 %v311, %v321
  %v334 = vmul.f32 %v312, %v321
  %v335 = vmul.f32 %v313, %v321
  %v336 = vmul.f32 %v314, %v321
  %v337 = vmul.f32 %v315, %v321
  %v338 = vmul.f32 %v316, %v321
  %v339 = vadd.f32 %v285, %v323
  %v340 = vadd.f32 %v286, %v324
  %v341 = vadd.f32 %v287, %v325
  %v342 = vadd.f32 %v288, %v326
  %v343 = vadd.f32 %v289, %v327
  %v344 = vadd.f32 %v290, %v328
  %v345 = vadd.f32 %v291, %v329
  %v346 = vadd.f32 %v292, %v330
  %v347 = vadd.f32 %v293, %v331
  %v348 = vadd.f32 %v294, %v332
  %v349 = vadd.f32 %v295, %v333
  %v350 = vadd.f32 %v296, %v334
  %v351 = vadd.f32 %v297, %v335
  %v352 = vadd.f32 %v298, %v336
  %v353 = vadd.f32 %v299, %v337
  %v354 = vadd.f32 %v300, %v338
  %v355 = vld [vmem:[%s0 + $0x18] sm:$0xff]
  %v356 = vld [vmem:[%s0 + $0x58] sm:$0xff]
  %v357 = vld [vmem:[%s0 + $0x98] sm:$0xff]
  %v358 = vld [vmem:[%s0 + $0xd8] sm:$0xff]
  %v359 = vld [vmem:[%s0 + $0x118] sm:$0xff]
  %v360 = vld [vmem:[%s0 + $0x158] sm:$0xff]
  %v361 = vld [vmem:[%s0 + $0x198] sm:$0xff]
  %v362 = vld [vmem:[%s0 + $0x1d8] sm:$0xff]
  %v363 = vld [vmem:[%s0 + $0x258] sm:$0xff]
  %v364 = vld [vmem:[%s0 + $0x298] sm:$0xff]
  %v365 = vld [vmem:[%s0 + $0x2d8] sm:$0xff]
  %v366 = vld [vmem:[%s0 + $0x318] sm:$0xff]
  %v367 = vld [vmem:[%s0 + $0x358] sm:$0xff]
  %v368 = vld [vmem:[%s0 + $0x398] sm:$0xff]
  %v369 = vld [vmem:[%s0 + $0x3d8] sm:$0xff]
  %v370 = vld [vmem:[%s0 + $0x418] sm:$0xff]
  %v372 = vlaneseq
  %v373 = vshrl.u32 %v372, 7
  %v374 = vsub.s32 0, %v373
  %v375 = vrot.slane %v21, %v374
  %v377 = vmul.f32 %v355, %v375
  %v378 = vmul.f32 %v356, %v375
  %v379 = vmul.f32 %v357, %v375
  %v380 = vmul.f32 %v358, %v375
  %v381 = vmul.f32 %v359, %v375
  %v382 = vmul.f32 %v360, %v375
  %v383 = vmul.f32 %v361, %v375
  %v384 = vmul.f32 %v362, %v375
  %v385 = vmul.f32 %v363, %v375
  %v386 = vmul.f32 %v364, %v375
  %v387 = vmul.f32 %v365, %v375
  %v388 = vmul.f32 %v366, %v375
  %v389 = vmul.f32 %v367, %v375
  %v390 = vmul.f32 %v368, %v375
  %v391 = vmul.f32 %v369, %v375
  %v392 = vmul.f32 %v370, %v375
  %v393 = vadd.f32 %v339, %v377
  %v394 = vadd.f32 %v340, %v378
  %v395 = vadd.f32 %v341, %v379
  %v396 = vadd.f32 %v342, %v380
  %v397 = vadd.f32 %v343, %v381
  %v398 = vadd.f32 %v344, %v382
  %v399 = vadd.f32 %v345, %v383
  %v400 = vadd.f32 %v346, %v384
  %v401 = vadd.f32 %v347, %v385
  %v402 = vadd.f32 %v348, %v386
  %v403 = vadd.f32 %v349, %v387
  %v404 = vadd.f32 %v350, %v388
  %v405 = vadd.f32 %v351, %v389
  %v406 = vadd.f32 %v352, %v390
  %v407 = vadd.f32 %v353, %v391
  %v408 = vadd.f32 %v354, %v392
  %v409 = vld [vmem:[%s0 + $0x10] sm:$0xfe]
  %v410 = vld [vmem:[%s0 + $0x30] sm:$0x1]
  %v411 = vld [vmem:[%s0 + $0x50] sm:$0xfe]
  %v412 = vld [vmem:[%s0 + $0x70] sm:$0x1]
  %v413 = vld [vmem:[%s0 + $0x90] sm:$0xfe]
  %v414 = vld [vmem:[%s0 + $0xb0] sm:$0x1]
  %v415 = vld [vmem:[%s0 + $0xd0] sm:$0xfe]
  %v416 = vld [vmem:[%s0 + $0xf0] sm:$0x1]
  %v417 = vld [vmem:[%s0 + $0x110] sm:$0xfe]
  %v418 = vld [vmem:[%s0 + $0x130] sm:$0x1]
  %v419 = vld [vmem:[%s0 + $0x150] sm:$0xfe]
  %v420 = vld [vmem:[%s0 + $0x170] sm:$0x1]
  %v421 = vld [vmem:[%s0 + $0x190] sm:$0xfe]
  %v422 = vld [vmem:[%s0 + $0x1b0] sm:$0x1]
  %v423 = vld [vmem:[%s0 + $0x1d0] sm:$0xfe]
  %v424 = vld [vmem:[%s0 + $0x1f0] sm:$0x1]
  %v425 = vld [vmem:[%s0 + $0x250] sm:$0xfe]
  %v426 = vld [vmem:[%s0 + $0x270] sm:$0x1]
  %v427 = vld [vmem:[%s0 + $0x290] sm:$0xfe]
  %v428 = vld [vmem:[%s0 + $0x2b0] sm:$0x1]
  %v429 = vld [vmem:[%s0 + $0x2d0] sm:$0xfe]
  %v430 = vld [vmem:[%s0 + $0x2f0] sm:$0x1]
  %v431 = vld [vmem:[%s0 + $0x310] sm:$0xfe]
  %v432 = vld [vmem:[%s0 + $0x330] sm:$0x1]
  %v433 = vld [vmem:[%s0 + $0x350] sm:$0xfe]
  %v434 = vld [vmem:[%s0 + $0x370] sm:$0x1]
  %v435 = vld [vmem:[%s0 + $0x390] sm:$0xfe]
  %v436 = vld [vmem:[%s0 + $0x3b0] sm:$0x1]
  %v437 = vld [vmem:[%s0 + $0x3d0] sm:$0xfe]
  %v438 = vld [vmem:[%s0 + $0x3f0] sm:$0x1]
  %v439 = vld [vmem:[%s0 + $0x410] sm:$0xfe]
  %v440 = vld [vmem:[%s0 + $0x430] sm:$0x1]
  %v442 = vlaneseq
  %v443 = vshrl.u32 %v442, 7
  %v444 = vsub.s32 0, %v443
  %v445 = vrot.slane %v22, %v444
  %v447 = vmul.f32 %v409, %v445
  %v448 = vmul.f32 %v410, %v445
  %v449 = vmul.f32 %v411, %v445
  %v450 = vmul.f32 %v412, %v445
  %v451 = vmul.f32 %v413, %v445
  %v452 = vmul.f32 %v414, %v445
  %v453 = vmul.f32 %v415, %v445
  %v454 = vmul.f32 %v416, %v445
  %v455 = vmul.f32 %v417, %v445
  %v456 = vmul.f32 %v418, %v445
  %v457 = vmul.f32 %v419, %v445
  %v458 = vmul.f32 %v420, %v445
  %v459 = vmul.f32 %v421, %v445
  %v460 = vmul.f32 %v422, %v445
  %v461 = vmul.f32 %v423, %v445
  %v462 = vmul.f32 %v424, %v445
  %v463 = vmul.f32 %v425, %v445
  %v464 = vmul.f32 %v426, %v445
  %v465 = vmul.f32 %v427, %v445
  %v466 = vmul.f32 %v428, %v445
  %v467 = vmul.f32 %v429, %v445
  %v468 = vmul.f32 %v430, %v445
  %v469 = vmul.f32 %v431, %v445
  %v470 = vmul.f32 %v432, %v445
  %v471 = vmul.f32 %v433, %v445
  %v472 = vmul.f32 %v434, %v445
  %v473 = vmul.f32 %v435, %v445
  %v474 = vmul.f32 %v436, %v445
  %v475 = vmul.f32 %v437, %v445
  %v476 = vmul.f32 %v438, %v445
  %v477 = vmul.f32 %v439, %v445
  %v478 = vmul.f32 %v440, %v445
  %v511 = vrot.slane %v447, 1
  %v512 = vrot.slane %v448, 1
  %v513 = vsel %vm220, %v511, %v512
  %v514 = vrot.slane %v449, 1
  %v515 = vrot.slane %v450, 1
  %v516 = vsel %vm220, %v514, %v515
  %v517 = vrot.slane %v451, 1
  %v518 = vrot.slane %v452, 1
  %v519 = vsel %vm220, %v517, %v518
  %v520 = vrot.slane %v453, 1
  %v521 = vrot.slane %v454, 1
  %v522 = vsel %vm220, %v520, %v521
  %v523 = vrot.slane %v455, 1
  %v524 = vrot.slane %v456, 1
  %v525 = vsel %vm220, %v523, %v524
  %v526 = vrot.slane %v457, 1
  %v527 = vrot.slane %v458, 1
  %v528 = vsel %vm220, %v526, %v527
  %v529 = vrot.slane %v459, 1
  %v530 = vrot.slane %v460, 1
  %v531 = vsel %vm220, %v529, %v530
  %v532 = vrot.slane %v461, 1
  %v533 = vrot.slane %v462, 1
  %v534 = vsel %vm220, %v532, %v533
  %v535 = vrot.slane %v463, 1
  %v536 = vrot.slane %v464, 1
  %v537 = vsel %vm220, %v535, %v536
  %v538 = vrot.slane %v465, 1
  %v539 = vrot.slane %v466, 1
  %v540 = vsel %vm220, %v538, %v539
  %v541 = vrot.slane %v467, 1
  %v542 = vrot.slane %v468, 1
  %v543 = vsel %vm220, %v541, %v542
  %v544 = vrot.slane %v469, 1
  %v545 = vrot.slane %v470, 1
  %v546 = vsel %vm220, %v544, %v545
  %v547 = vrot.slane %v471, 1
  %v548 = vrot.slane %v472, 1
  %v549 = vsel %vm220, %v547, %v548
  %v550 = vrot.slane %v473, 1
  %v551 = vrot.slane %v474, 1
  %v552 = vsel %vm220, %v550, %v551
  %v553 = vrot.slane %v475, 1
  %v554 = vrot.slane %v476, 1
  %v555 = vsel %vm220, %v553, %v554
  %v556 = vrot.slane %v477, 1
  %v557 = vrot.slane %v478, 1
  %v558 = vsel %vm220, %v556, %v557
  %v575 = vadd.f32 %v393, %v513
  %v576 = vadd.f32 %v394, %v516
  %v577 = vadd.f32 %v395, %v519
  %v578 = vadd.f32 %v396, %v522
  %v579 = vadd.f32 %v397, %v525
  %v580 = vadd.f32 %v398, %v528
  %v581 = vadd.f32 %v399, %v531
  %v582 = vadd.f32 %v400, %v534
  %v583 = vadd.f32 %v401, %v537
  %v584 = vadd.f32 %v402, %v540
  %v585 = vadd.f32 %v403, %v543
  %v586 = vadd.f32 %v404, %v546
  %v587 = vadd.f32 %v405, %v549
  %v588 = vadd.f32 %v406, %v552
  %v589 = vadd.f32 %v407, %v555
  %v590 = vadd.f32 %v408, %v558
  %s591 = scalar_lea.vmem %s0, 64
  %v592 = vld [vmem:[%s591] sm:$0xff]
  %v593 = vld [vmem:[%s591 + $0x40] sm:$0xff]
  %v594 = vld [vmem:[%s591 + $0x80] sm:$0xff]
  %v595 = vld [vmem:[%s591 + $0xc0] sm:$0xff]
  %v596 = vld [vmem:[%s591 + $0x100] sm:$0xff]
  %v597 = vld [vmem:[%s591 + $0x140] sm:$0xff]
  %v598 = vld [vmem:[%s591 + $0x180] sm:$0xff]
  %v599 = vld [vmem:[%s591 + $0x1c0] sm:$0xff]
  %v600 = vld [vmem:[%s591 + $0x240] sm:$0xff]
  %v601 = vld [vmem:[%s591 + $0x280] sm:$0xff]
  %v602 = vld [vmem:[%s591 + $0x2c0] sm:$0xff]
  %v603 = vld [vmem:[%s591 + $0x300] sm:$0xff]
  %v604 = vld [vmem:[%s591 + $0x340] sm:$0xff]
  %v605 = vld [vmem:[%s591 + $0x380] sm:$0xff]
  %v606 = vld [vmem:[%s591 + $0x3c0] sm:$0xff]
  %v607 = vld [vmem:[%s591 + $0x400] sm:$0xff]
  %v609 = vlaneseq
  %v610 = vshrl.u32 %v609, 7
  %v611 = vsub.s32 0, %v610
  %v612 = vrot.slane %v23, %v611
  %v614 = vmul.f32 %v592, %v612
  %v615 = vmul.f32 %v593, %v612
  %v616 = vmul.f32 %v594, %v612
  %v617 = vmul.f32 %v595, %v612
  %v618 = vmul.f32 %v596, %v612
  %v619 = vmul.f32 %v597, %v612
  %v620 = vmul.f32 %v598, %v612
  %v621 = vmul.f32 %v599, %v612
  %v622 = vmul.f32 %v600, %v612
  %v623 = vmul.f32 %v601, %v612
  %v624 = vmul.f32 %v602, %v612
  %v625 = vmul.f32 %v603, %v612
  %v626 = vmul.f32 %v604, %v612
  %v627 = vmul.f32 %v605, %v612
  %v628 = vmul.f32 %v606, %v612
  %v629 = vmul.f32 %v607, %v612
  %v630 = vadd.f32 %v575, %v614
  %v631 = vadd.f32 %v576, %v615
  %v632 = vadd.f32 %v577, %v616
  %v633 = vadd.f32 %v578, %v617
  %v634 = vadd.f32 %v579, %v618
  %v635 = vadd.f32 %v580, %v619
  %v636 = vadd.f32 %v581, %v620
  %v637 = vadd.f32 %v582, %v621
  %v638 = vadd.f32 %v583, %v622
  %v639 = vadd.f32 %v584, %v623
  %v640 = vadd.f32 %v585, %v624
  %v641 = vadd.f32 %v586, %v625
  %v642 = vadd.f32 %v587, %v626
  %v643 = vadd.f32 %v588, %v627
  %v644 = vadd.f32 %v589, %v628
  %v645 = vadd.f32 %v590, %v629
  %v646 = vld [vmem:[%s591 + $0x8] sm:$0xff]
  %v647 = vld [vmem:[%s591 + $0x48] sm:$0xff]
  %v648 = vld [vmem:[%s591 + $0x88] sm:$0xff]
  %v649 = vld [vmem:[%s591 + $0xc8] sm:$0xff]
  %v650 = vld [vmem:[%s591 + $0x108] sm:$0xff]
  %v651 = vld [vmem:[%s591 + $0x148] sm:$0xff]
  %v652 = vld [vmem:[%s591 + $0x188] sm:$0xff]
  %v653 = vld [vmem:[%s591 + $0x1c8] sm:$0xff]
  %v654 = vld [vmem:[%s591 + $0x248] sm:$0xff]
  %v655 = vld [vmem:[%s591 + $0x288] sm:$0xff]
  %v656 = vld [vmem:[%s591 + $0x2c8] sm:$0xff]
  %v657 = vld [vmem:[%s591 + $0x308] sm:$0xff]
  %v658 = vld [vmem:[%s591 + $0x348] sm:$0xff]
  %v659 = vld [vmem:[%s591 + $0x388] sm:$0xff]
  %v660 = vld [vmem:[%s591 + $0x3c8] sm:$0xff]
  %v661 = vld [vmem:[%s591 + $0x408] sm:$0xff]
  %v663 = vlaneseq
  %v664 = vshrl.u32 %v663, 7
  %v665 = vsub.s32 0, %v664
  %v666 = vrot.slane %v24, %v665
  %v668 = vmul.f32 %v646, %v666
  %v669 = vmul.f32 %v647, %v666
  %v670 = vmul.f32 %v648, %v666
  %v671 = vmul.f32 %v649, %v666
  %v672 = vmul.f32 %v650, %v666
  %v673 = vmul.f32 %v651, %v666
  %v674 = vmul.f32 %v652, %v666
  %v675 = vmul.f32 %v653, %v666
  %v676 = vmul.f32 %v654, %v666
  %v677 = vmul.f32 %v655, %v666
  %v678 = vmul.f32 %v656, %v666
  %v679 = vmul.f32 %v657, %v666
  %v680 = vmul.f32 %v658, %v666
  %v681 = vmul.f32 %v659, %v666
  %v682 = vmul.f32 %v660, %v666
  %v683 = vmul.f32 %v661, %v666
  %v684 = vadd.f32 %v630, %v668
  %v685 = vadd.f32 %v631, %v669
  %v686 = vadd.f32 %v632, %v670
  %v687 = vadd.f32 %v633, %v671
  %v688 = vadd.f32 %v634, %v672
  %v689 = vadd.f32 %v635, %v673
  %v690 = vadd.f32 %v636, %v674
  %v691 = vadd.f32 %v637, %v675
  %v692 = vadd.f32 %v638, %v676
  %v693 = vadd.f32 %v639, %v677
  %v694 = vadd.f32 %v640, %v678
  %v695 = vadd.f32 %v641, %v679
  %v696 = vadd.f32 %v642, %v680
  %v697 = vadd.f32 %v643, %v681
  %v698 = vadd.f32 %v644, %v682
  %v699 = vadd.f32 %v645, %v683
  %v700 = vld [vmem:[%s591] sm:$0xfe]
  %v701 = vld [vmem:[%s591 + $0x20] sm:$0x1]
  %v702 = vld [vmem:[%s591 + $0x40] sm:$0xfe]
  %v703 = vld [vmem:[%s591 + $0x60] sm:$0x1]
  %v704 = vld [vmem:[%s591 + $0x80] sm:$0xfe]
  %v705 = vld [vmem:[%s591 + $0xa0] sm:$0x1]
  %v706 = vld [vmem:[%s591 + $0xc0] sm:$0xfe]
  %v707 = vld [vmem:[%s591 + $0xe0] sm:$0x1]
  %v708 = vld [vmem:[%s591 + $0x100] sm:$0xfe]
  %v709 = vld [vmem:[%s591 + $0x120] sm:$0x1]
  %v710 = vld [vmem:[%s591 + $0x140] sm:$0xfe]
  %v711 = vld [vmem:[%s591 + $0x160] sm:$0x1]
  %v712 = vld [vmem:[%s591 + $0x180] sm:$0xfe]
  %v713 = vld [vmem:[%s591 + $0x1a0] sm:$0x1]
  %v714 = vld [vmem:[%s591 + $0x1c0] sm:$0xfe]
  %v715 = vld [vmem:[%s591 + $0x1e0] sm:$0x1]
  %v716 = vld [vmem:[%s591 + $0x240] sm:$0xfe]
  %v717 = vld [vmem:[%s591 + $0x260] sm:$0x1]
  %v718 = vld [vmem:[%s591 + $0x280] sm:$0xfe]
  %v719 = vld [vmem:[%s591 + $0x2a0] sm:$0x1]
  %v720 = vld [vmem:[%s591 + $0x2c0] sm:$0xfe]
  %v721 = vld [vmem:[%s591 + $0x2e0] sm:$0x1]
  %v722 = vld [vmem:[%s591 + $0x300] sm:$0xfe]
  %v723 = vld [vmem:[%s591 + $0x320] sm:$0x1]
  %v724 = vld [vmem:[%s591 + $0x340] sm:$0xfe]
  %v725 = vld [vmem:[%s591 + $0x360] sm:$0x1]
  %v726 = vld [vmem:[%s591 + $0x380] sm:$0xfe]
  %v727 = vld [vmem:[%s591 + $0x3a0] sm:$0x1]
  %v728 = vld [vmem:[%s591 + $0x3c0] sm:$0xfe]
  %v729 = vld [vmem:[%s591 + $0x3e0] sm:$0x1]
  %v730 = vld [vmem:[%s591 + $0x400] sm:$0xfe]
  %v731 = vld [vmem:[%s591 + $0x420] sm:$0x1]
  %v733 = vlaneseq
  %v734 = vshrl.u32 %v733, 7
  %v735 = vsub.s32 0, %v734
  %v736 = vrot.slane %v25, %v735
  %v738 = vmul.f32 %v700, %v736
  %v739 = vmul.f32 %v701, %v736
  %v740 = vmul.f32 %v702, %v736
  %v741 = vmul.f32 %v703, %v736
  %v742 = vmul.f32 %v704, %v736
  %v743 = vmul.f32 %v705, %v736
  %v744 = vmul.f32 %v706, %v736
  %v745 = vmul.f32 %v707, %v736
  %v746 = vmul.f32 %v708, %v736
  %v747 = vmul.f32 %v709, %v736
  %v748 = vmul.f32 %v710, %v736
  %v749 = vmul.f32 %v711, %v736
  %v750 = vmul.f32 %v712, %v736
  %v751 = vmul.f32 %v713, %v736
  %v752 = vmul.f32 %v714, %v736
  %v753 = vmul.f32 %v715, %v736
  %v754 = vmul.f32 %v716, %v736
  %v755 = vmul.f32 %v717, %v736
  %v756 = vmul.f32 %v718, %v736
  %v757 = vmul.f32 %v719, %v736
  %v758 = vmul.f32 %v720, %v736
  %v759 = vmul.f32 %v721, %v736
  %v760 = vmul.f32 %v722, %v736
  %v761 = vmul.f32 %v723, %v736
  %v762 = vmul.f32 %v724, %v736
  %v763 = vmul.f32 %v725, %v736
  %v764 = vmul.f32 %v726, %v736
  %v765 = vmul.f32 %v727, %v736
  %v766 = vmul.f32 %v728, %v736
  %v767 = vmul.f32 %v729, %v736
  %v768 = vmul.f32 %v730, %v736
  %v769 = vmul.f32 %v731, %v736
  %v802 = vrot.slane %v738, 1
  %v803 = vrot.slane %v739, 1
  %v804 = vsel %vm220, %v802, %v803
  %v805 = vrot.slane %v740, 1
  %v806 = vrot.slane %v741, 1
  %v807 = vsel %vm220, %v805, %v806
  %v808 = vrot.slane %v742, 1
  %v809 = vrot.slane %v743, 1
  %v810 = vsel %vm220, %v808, %v809
  %v811 = vrot.slane %v744, 1
  %v812 = vrot.slane %v745, 1
  %v813 = vsel %vm220, %v811, %v812
  %v814 = vrot.slane %v746, 1
  %v815 = vrot.slane %v747, 1
  %v816 = vsel %vm220, %v814, %v815
  %v817 = vrot.slane %v748, 1
  %v818 = vrot.slane %v749, 1
  %v819 = vsel %vm220, %v817, %v818
  %v820 = vrot.slane %v750, 1
  %v821 = vrot.slane %v751, 1
  %v822 = vsel %vm220, %v820, %v821
  %v823 = vrot.slane %v752, 1
  %v824 = vrot.slane %v753, 1
  %v825 = vsel %vm220, %v823, %v824
  %v826 = vrot.slane %v754, 1
  %v827 = vrot.slane %v755, 1
  %v828 = vsel %vm220, %v826, %v827
  %v829 = vrot.slane %v756, 1
  %v830 = vrot.slane %v757, 1
  %v831 = vsel %vm220, %v829, %v830
  %v832 = vrot.slane %v758, 1
  %v833 = vrot.slane %v759, 1
  %v834 = vsel %vm220, %v832, %v833
  %v835 = vrot.slane %v760, 1
  %v836 = vrot.slane %v761, 1
  %v837 = vsel %vm220, %v835, %v836
  %v838 = vrot.slane %v762, 1
  %v839 = vrot.slane %v763, 1
  %v840 = vsel %vm220, %v838, %v839
  %v841 = vrot.slane %v764, 1
  %v842 = vrot.slane %v765, 1
  %v843 = vsel %vm220, %v841, %v842
  %v844 = vrot.slane %v766, 1
  %v845 = vrot.slane %v767, 1
  %v846 = vsel %vm220, %v844, %v845
  %v847 = vrot.slane %v768, 1
  %v848 = vrot.slane %v769, 1
  %v849 = vsel %vm220, %v847, %v848
  %v866 = vadd.f32 %v684, %v804
  %v867 = vadd.f32 %v685, %v807
  %v868 = vadd.f32 %v686, %v810
  %v869 = vadd.f32 %v687, %v813
  %v870 = vadd.f32 %v688, %v816
  %v871 = vadd.f32 %v689, %v819
  %v872 = vadd.f32 %v690, %v822
  %v873 = vadd.f32 %v691, %v825
  %v874 = vadd.f32 %v692, %v828
  %v875 = vadd.f32 %v693, %v831
  %v876 = vadd.f32 %v694, %v834
  %v877 = vadd.f32 %v695, %v837
  %v878 = vadd.f32 %v696, %v840
  %v879 = vadd.f32 %v697, %v843
  %v880 = vadd.f32 %v698, %v846
  %v881 = vadd.f32 %v699, %v849
  %v882 = vpack.c.bf16 %v867, %v866
  %v883 = vpack.c.bf16 %v869, %v868
  %v884 = vpack.c.bf16 %v871, %v870
  %v885 = vpack.c.bf16 %v873, %v872
  %v886 = vpack.c.bf16 %v875, %v874
  %v887 = vpack.c.bf16 %v877, %v876
  %v888 = vpack.c.bf16 %v879, %v878
  %v889 = vpack.c.bf16 %v881, %v880
  %v890 = vld [vmem:[%s2] sm:$0xf]
  %v891 = vld [vmem:[%s2 + $0x4] sm:$0xf]
  %v892 = vld [vmem:[%s2 + $0x8] sm:$0xf]
  %v893 = vld [vmem:[%s2 + $0xc] sm:$0xf]
  %v894 = vld [vmem:[%s2 + $0x10] sm:$0xf]
  %v895 = vld [vmem:[%s2 + $0x14] sm:$0xf]
  %v896 = vld [vmem:[%s2 + $0x18] sm:$0xf]
  %v897 = vld [vmem:[%s2 + $0x1c] sm:$0xf]
  %v898 = vld [vmem:[%s2 + $0x20] sm:$0xf]
  %v899 = vld [vmem:[%s2 + $0x24] sm:$0xf]
  %v900 = vld [vmem:[%s2 + $0x28] sm:$0xf]
  %v901 = vld [vmem:[%s2 + $0x2c] sm:$0xf]
  %v902 = vld [vmem:[%s2 + $0x30] sm:$0xf]
  %v903 = vld [vmem:[%s2 + $0x34] sm:$0xf]
  %v904 = vld [vmem:[%s2 + $0x38] sm:$0xf]
  %v905 = vld [vmem:[%s2 + $0x3c] sm:$0xf]
  %v922 = vunpack.c.l.b16 %v890
  %v923 = vunpack.c.l.b16 %v891
  %v924 = vunpack.c.l.b16 %v892
  %v925 = vunpack.c.l.b16 %v893
  %v926 = vunpack.c.l.b16 %v894
  %v927 = vunpack.c.l.b16 %v895
  %v928 = vunpack.c.l.b16 %v896
  %v929 = vunpack.c.l.b16 %v897
  %v930 = vunpack.c.l.b16 %v898
  %v931 = vunpack.c.l.b16 %v899
  %v932 = vunpack.c.l.b16 %v900
  %v933 = vunpack.c.l.b16 %v901
  %v934 = vunpack.c.l.b16 %v902
  %v935 = vunpack.c.l.b16 %v903
  %v936 = vunpack.c.l.b16 %v904
  %v937 = vunpack.c.l.b16 %v905
  %v938 = vpack.c.b16 %v923, %v922
  %v939 = vpack.c.b16 %v925, %v924
  %v940 = vpack.c.b16 %v927, %v926
  %v941 = vpack.c.b16 %v929, %v928
  %v942 = vpack.c.b16 %v931, %v930
  %v943 = vpack.c.b16 %v933, %v932
  %v944 = vpack.c.b16 %v935, %v934
  %v945 = vpack.c.b16 %v937, %v936
  %954 = vmatprep.subr.bf16.mxu0 0
  %955 = vmatpush1.bf16.msra.mxu0 %v938
  %956 = vmatprep.subr.bf16.mxu0 0
  %957 = vmatpush1.bf16.msra.mxu0 %v939
  %958 = vmatprep.subr.bf16.mxu0 0
  %959 = vmatpush1.bf16.msra.mxu0 %v940
  %960 = vmatprep.subr.bf16.mxu0 0
  %961 = vmatpush1.bf16.msra.mxu0 %v941
  %962 = vmatprep.subr.bf16.mxu0 0
  %963 = vmatpush1.bf16.msra.mxu0 %v942
  %964 = vmatprep.subr.bf16.mxu0 0
  %965 = vmatpush1.bf16.msra.mxu0 %v943
  %966 = vmatprep.subr.bf16.mxu0 0
  %967 = vmatpush1.bf16.msra.mxu0 %v944
  %968 = vmatprep.subr.bf16.mxu0 0
  %969 = vmatpush1.bf16.msra.mxu0 %v945
  %970 = vmatprep.subr.bf16.mxu0 0
  %971 = vmatpush1.bf16.msra.mxu0 0
  %972 = vmatprep.subr.bf16.mxu0 0
  %973 = vmatpush1.bf16.msra.mxu0 0
  %974 = vmatprep.subr.bf16.mxu0 0
  %975 = vmatpush1.bf16.msra.mxu0 0
  %976 = vmatprep.subr.bf16.mxu0 0
  %977 = vmatpush1.bf16.msra.mxu0 0
  %978 = vmatprep.subr.bf16.mxu0 0
  %979 = vmatpush1.bf16.msra.mxu0 0
  %980 = vmatprep.subr.bf16.mxu0 0
  %981 = vmatpush1.bf16.msra.mxu0 0
  %982 = vmatprep.subr.bf16.mxu0 0
  %983 = vmatpush1.bf16.msra.mxu0 0
  %984 = vmatprep.subr.bf16.mxu0 0
  %985 = vmatpush1.bf16.msra.mxu0 0
  %986 = vmatprep.mubr.bf16.mxu0 0
  %987 = vmatmul.mubr.bf16.gmra.mrb[0].mxu0 %v882
  %v988 = vpop.f32.mrb[0].mxu0
  %v989 = vadd.f32 0.0, %v988
  %v990 = vpop.f32.mrb[0].mxu0
  %v991 = vpop.f32.mrb[0].mxu0
  %v992 = vadd.f32 0.0, %v991
  %v993 = vpop.f32.mrb[0].mxu0
  %994 = vmatprep.mubr.bf16.mxu0 0
  %995 = vmatmul.mubr.bf16.gmra.mrb[0].mxu0 %v883
  %v996 = vpop.f32.mrb[0].mxu0
  %v997 = vadd.f32 0.0, %v996
  %v998 = vpop.f32.mrb[0].mxu0
  %v999 = vpop.f32.mrb[0].mxu0
  %v1000 = vadd.f32 0.0, %v999
  %v1001 = vpop.f32.mrb[0].mxu0
  %1002 = vmatprep.mubr.bf16.mxu0 0
  %1003 = vmatmul.mubr.bf16.gmra.mrb[0].mxu0 %v884
  %v1004 = vpop.f32.mrb[0].mxu0
  %v1005 = vadd.f32 0.0, %v1004
  %v1006 = vpop.f32.mrb[0].mxu0
  %v1007 = vpop.f32.mrb[0].mxu0
  %v1008 = vadd.f32 0.0, %v1007
  %v1009 = vpop.f32.mrb[0].mxu0
  %1010 = vmatprep.mubr.bf16.mxu0 0
  %1011 = vmatmul.mubr.bf16.gmra.mrb[0].mxu0 %v885
  %v1012 = vpop.f32.mrb[0].mxu0
  %v1013 = vadd.f32 0.0, %v1012
  %v1014 = vpop.f32.mrb[0].mxu0
  %v1015 = vpop.f32.mrb[0].mxu0
  %v1016 = vadd.f32 0.0, %v1015
  %v1017 = vpop.f32.mrb[0].mxu0
  %1018 = vmatprep.mubr.bf16.mxu0 0
  %1019 = vmatmul.mubr.bf16.gmra.mrb[0].mxu0 %v886
  %v1020 = vpop.f32.mrb[0].mxu0
  %v1021 = vadd.f32 0.0, %v1020
  %v1022 = vpop.f32.mrb[0].mxu0
  %v1023 = vpop.f32.mrb[0].mxu0
  %v1024 = vadd.f32 0.0, %v1023
  %v1025 = vpop.f32.mrb[0].mxu0
  %1026 = vmatprep.mubr.bf16.mxu0 0
  %1027 = vmatmul.mubr.bf16.gmra.mrb[0].mxu0 %v887
  %v1028 = vpop.f32.mrb[0].mxu0
  %v1029 = vadd.f32 0.0, %v1028
  %v1030 = vpop.f32.mrb[0].mxu0
  %v1031 = vpop.f32.mrb[0].mxu0
  %v1032 = vadd.f32 0.0, %v1031
  %v1033 = vpop.f32.mrb[0].mxu0
  %1034 = vmatprep.mubr.bf16.mxu0 0
  %1035 = vmatmul.mubr.bf16.gmra.mrb[0].mxu0 %v888
  %v1036 = vpop.f32.mrb[0].mxu0
  %v1037 = vadd.f32 0.0, %v1036
  %v1038 = vpop.f32.mrb[0].mxu0
  %v1039 = vpop.f32.mrb[0].mxu0
  %v1040 = vadd.f32 0.0, %v1039
  %v1041 = vpop.f32.mrb[0].mxu0
  %1042 = vmatprep.mubr.bf16.mxu0 0
  %1043 = vmatmul.mubr.bf16.gmra.mrb[0].mxu0 %v889
  %v1044 = vpop.f32.mrb[0].mxu0
  %v1045 = vadd.f32 0.0, %v1044
  %v1046 = vpop.f32.mrb[0].mxu0
  %v1047 = vpop.f32.mrb[0].mxu0
  %v1048 = vadd.f32 0.0, %v1047
  %v1049 = vpop.f32.mrb[0].mxu0
  %1050 = vdwg.mxu0
  %v1051 = vpack.c.bf16 %v989, %v989
  %v1052 = vpack.c.bf16 %v992, %v992
  %v1053 = vpack.c.bf16 %v997, %v997
  %v1054 = vpack.c.bf16 %v1000, %v1000
  %v1055 = vpack.c.bf16 %v1005, %v1005
  %v1056 = vpack.c.bf16 %v1008, %v1008
  %v1057 = vpack.c.bf16 %v1013, %v1013
  %v1058 = vpack.c.bf16 %v1016, %v1016
  %v1059 = vpack.c.bf16 %v1021, %v1021
  %v1060 = vpack.c.bf16 %v1024, %v1024
  %v1061 = vpack.c.bf16 %v1029, %v1029
  %v1062 = vpack.c.bf16 %v1032, %v1032
  %v1063 = vpack.c.bf16 %v1037, %v1037
  %v1064 = vpack.c.bf16 %v1040, %v1040
  %v1065 = vpack.c.bf16 %v1045, %v1045
  %v1066 = vpack.c.bf16 %v1048, %v1048
  %1067 = vst [vmem:[%s3] sm:$0xf] %v1051
  %1068 = vst [vmem:[%s3 + $0x4] sm:$0xf] %v1052
  %1069 = vst [vmem:[%s3 + $0x8] sm:$0xf] %v1053
  %1070 = vst [vmem:[%s3 + $0xc] sm:$0xf] %v1054
  %1071 = vst [vmem:[%s3 + $0x10] sm:$0xf] %v1055
  %1072 = vst [vmem:[%s3 + $0x14] sm:$0xf] %v1056
  %1073 = vst [vmem:[%s3 + $0x18] sm:$0xf] %v1057
  %1074 = vst [vmem:[%s3 + $0x1c] sm:$0xf] %v1058
  %1075 = vst [vmem:[%s3 + $0x20] sm:$0xf] %v1059
  %1076 = vst [vmem:[%s3 + $0x24] sm:$0xf] %v1060
  %1077 = vst [vmem:[%s3 + $0x28] sm:$0xf] %v1061
  %1078 = vst [vmem:[%s3 + $0x2c] sm:$0xf] %v1062
  %1079 = vst [vmem:[%s3 + $0x30] sm:$0xf] %v1063
  %1080 = vst [vmem:[%s3 + $0x34] sm:$0xf] %v1064
  %1081 = vst [vmem:[%s3 + $0x38] sm:$0xf] %v1065
  %1082 = vst [vmem:[%s3 + $0x3c] sm:$0xf] %v1066
  %v1083 = vadd.f32 %v989, %v992
  %v1084 = vadd.f32 %v1083, %v997
  %v1085 = vadd.f32 %v1084, %v1000
  %v1086 = vadd.f32 %v1085, %v1005
  %v1087 = vadd.f32 %v1086, %v1008
  %v1088 = vadd.f32 %v1087, %v1013
  %v1089 = vadd.f32 %v1088, %v1016
  %v1090 = vadd.f32 %v1089, %v1021
  %v1091 = vadd.f32 %v1090, %v1024
  %v1092 = vadd.f32 %v1091, %v1029
  %v1093 = vadd.f32 %v1092, %v1032
  %v1094 = vadd.f32 %v1093, %v1037
  %v1095 = vadd.f32 %v1094, %v1040
  %v1096 = vadd.f32 %v1095, %v1045
  %v1097 = vadd.f32 %v1096, %v1048
  %v1098 = vrot.slane %v1097, 4
  %v1099 = vadd.f32 %v1097, %v1098
  %v1100 = vrot.slane %v1099, 2
  %v1101 = vadd.f32 %v1099, %v1100
  %v1102 = vrot.slane %v1101, 1
  %v1103 = vadd.f32 %v1101, %v1102
  %v1104 = vmul.f32 %v989, %v989
  %v1105 = vmul.f32 %v992, %v992
  %v1106 = vmul.f32 %v997, %v997
  %v1107 = vmul.f32 %v1000, %v1000
  %v1108 = vmul.f32 %v1005, %v1005
  %v1109 = vmul.f32 %v1008, %v1008
  %v1110 = vmul.f32 %v1013, %v1013
  %v1111 = vmul.f32 %v1016, %v1016
  %v1112 = vmul.f32 %v1021, %v1021
  %v1113 = vmul.f32 %v1024, %v1024
  %v1114 = vmul.f32 %v1029, %v1029
  %v1115 = vmul.f32 %v1032, %v1032
  %v1116 = vmul.f32 %v1037, %v1037
  %v1117 = vmul.f32 %v1040, %v1040
  %v1118 = vmul.f32 %v1045, %v1045
  %v1119 = vmul.f32 %v1048, %v1048
  %v1120 = vadd.f32 %v1104, %v1105
  %v1121 = vadd.f32 %v1120, %v1106
  %v1122 = vadd.f32 %v1121, %v1107
  %v1123 = vadd.f32 %v1122, %v1108
  %v1124 = vadd.f32 %v1123, %v1109
  %v1125 = vadd.f32 %v1124, %v1110
  %v1126 = vadd.f32 %v1125, %v1111
  %v1127 = vadd.f32 %v1126, %v1112
  %v1128 = vadd.f32 %v1127, %v1113
  %v1129 = vadd.f32 %v1128, %v1114
  %v1130 = vadd.f32 %v1129, %v1115
  %v1131 = vadd.f32 %v1130, %v1116
  %v1132 = vadd.f32 %v1131, %v1117
  %v1133 = vadd.f32 %v1132, %v1118
  %v1134 = vadd.f32 %v1133, %v1119
  %v1135 = vrot.slane %v1134, 4
  %v1136 = vadd.f32 %v1134, %v1135
  %v1137 = vrot.slane %v1136, 2
  %v1138 = vadd.f32 %v1136, %v1137
  %v1139 = vrot.slane %v1138, 1
  %v1140 = vadd.f32 %v1138, %v1139
  %vm1141 = vcmask 1040384
  %v1142 = vsel %vm1141, %v1103, %v1140
  %1143 = vst [vmem:[%s4] sm:$0x3] %v1142
  // Predicated region
  $region14: #{sep_conv_forward.3} parent=0 // pred_check
    _
  $region15: #{sep_conv_forward.3} parent=0 // pred_check_branch
    %1145 = sbr.rel (0) target = $region17
  $region16: #{sep_conv_forward.3} parent=0 // pred_region
    _
  $region17: #{sep_conv_forward.3} parent=0 // pred_fallthru
    _
  // Predicated region
  $region18: #{sep_conv_forward.3} parent=0 // pred_check
    _
  $region19: #{sep_conv_forward.3} parent=0 // pred_check_branch
    %1147 = sbr.rel (0) target = $region21
  $region20: #{sep_conv_forward.3} parent=0 // pred_region
    _
  $region21: #{sep_conv_forward.3} parent=0 // pred_fallthru
    _
  // Predicated region
  $region22: #{sep_conv_forward.3} parent=0 // pred_check
    _
  $region23: #{sep_conv_forward.3} parent=0 // pred_check_branch
    %1149 = sbr.rel (0) target = $region25
  $region24: #{sep_conv_forward.3} parent=0 // pred_region
    _
  $region25: #{sep_conv_forward.3} parent=0 // pred_fallthru
    _
  // Predicated region
  $region26: #{sep_conv_forward.3} parent=0 // pred_check
    _
  $region27: #{sep_conv_forward.3} parent=0 // pred_check_branch
    %1151 = sbr.rel (0) target = $region29
  $region28: #{sep_conv_forward.3} parent=0 // pred_region
    _
  $region29: #{sep_conv_forward.3} parent=0 // pred_fallthru
    _

</llo_original>
